<compile_context>
chip_gen: v7x
topology: tpu7x:2x2x1
jax: 0.10.0
libtpu: 0.0.40
codegen_flags: <defaults>
</compile_context>

<pallas_src>
import functools

import jax
import jax.numpy as jnp
from jax import lax
from jax.experimental import pallas as pl
from jax.experimental.pallas import tpu as pltpu


def _round_up(x, m):
    return ((x + m - 1) // m) * m


# ---------------------------------------------------------------------------
# Pallas kernel: fused tap-gather + single deep matmul + bias + ReLU for one
# image per grid step.
# ---------------------------------------------------------------------------
def _conv_relu_kernel(x_ref, w_ref, b_ref, o_ref, *, kh, kw, stride, Wrow, Ho,
                      Wo, Msup):
    """Shapes (Opad = padded out-channel count, K = kh*kw*C):

    x_ref: (L, C)        bf16  flattened, spatially padded NHWC image, pitch Wrow
    w_ref: (K, Opad)     bf16  tap-concat weight matrix
    b_ref: (1, Opad)     f32   bias
    o_ref: (Ho, Wo, Opad) f32  NHWC output block
    """
    # Gather the kh*kw taps as row-shifted views of the flat image and
    # concatenate them along the lane (channel) dim: one deep-K matmul, with
    # all tap accumulation kept inside the MXU's f32 accumulators.
    taps = []
    for t in range(kh * kw):
        d = (t // kw) * Wrow + (t % kw)          # static per-tap row offset
        if stride == 1:
            taps.append(x_ref[d:d + Msup, :])                     # (Msup, C)
        else:
            # TODO(synk): for stride > 1, compact once into a dense buffer
            # instead of kh*kw strided sublane gathers.
            taps.append(x_ref[pl.ds(d, Msup, stride), :])          # (Msup, C)
    cat = jnp.concatenate(taps, axis=-1)                           # (Msup, K) bf16

    acc = jnp.dot(cat, w_ref[...],
                  preferred_element_type=jnp.float32)              # (Msup, Opad) f32

    # Epilogue: one vectorized bias + ReLU pass, drop the (Wrow - Wo) garbage
    # columns of each output row, single lane-dense store.
    res = jnp.maximum(acc + b_ref[...], 0.0)                       # (Msup, Opad)
    opad = o_ref.shape[-1]
    o_ref[...] = res.reshape(Ho, Wrow, opad)[:, :Wo, :]


# ---------------------------------------------------------------------------
# ConvRelu forward (n_bits == 8 path):
#   fweight = dequant(weight_int8, scale, zero_point)   [per out-channel]
#   y = relu(conv2d(x, fweight, bias, stride, padding))
# ---------------------------------------------------------------------------
@functools.partial(jax.jit, static_argnames=("stride", "padding"))
def conv_relu_forward(x, weight_q, bias, scale, zero_point, *, stride=1, padding=0):
    """x: (N, C, H, W) f32; weight_q: (O, C, kh, kw) int8; returns (N, O, Ho, Wo) f32."""
    N, C, H, W = x.shape
    O, Cw, kh, kw = weight_q.shape
    assert Cw == C

    # Per-output-channel dequantisation; bf16 is the portable MXU operand type.
    fweight = (weight_q.astype(jnp.float32)
               - zero_point[:, None, None, None]) * scale[:, None, None, None]

    # Lane-dense padded out-channel count: 256-wide MXU tile on v6e/v7x-sized
    # layers, 128 otherwise.  (TODO(synk): pick per-chip via pltpu.get_tpu_info.)
    Opad = _round_up(O, 256) if O >= 128 else _round_up(O, 128)

    # Tap-concat weight matrix (K, Opad): row index (i*kw + j)*C + c matches
    # the kernel's tap concatenation order.
    wmat = jnp.transpose(fweight, (2, 3, 1, 0)).reshape(kh * kw * C, O)
    wmat = jnp.pad(wmat, ((0, 0), (0, Opad - O))).astype(jnp.bfloat16)
    bias_p = jnp.pad(bias.astype(jnp.float32), (0, Opad - O)).reshape(1, Opad)

    # Geometry: NHWC padded image flattened with row pitch Wrow (multiple of 8
    # sublanes, so the kernel's (Ho, Wrow, Opad) reshape is layout-preserving).
    Hp, Wp = H + 2 * padding, W + 2 * padding
    Ho = (Hp - kh) // stride + 1
    Wo = (Wp - kw) // stride + 1
    Wrow = _round_up(Wp, 8)
    Msup = Ho * Wrow                               # superset rows (pitch Wrow)
    d_max = (kh - 1) * Wrow + (kw - 1)
    L_need = d_max + stride * (Msup - 1) + 1       # last flat row read + 1
    Hrows = max(Hp, -(-L_need // Wrow))
    L = Hrows * Wrow

    # Single pad pass: halo + row-pitch padding + tail rows all at once; bf16
    # halves the input DMA.  reshape to (N, L, C) is free.
    x_nhwc = jnp.transpose(x, (0, 2, 3, 1)).astype(jnp.bfloat16)
    x_flat = jnp.pad(
        x_nhwc,
        ((0, 0),
         (padding, padding + (Hrows - Hp)),
         (padding, padding + (Wrow - Wp)),
         (0, 0)),
    ).reshape(N, L, C)

    kernel = functools.partial(_conv_relu_kernel, kh=kh, kw=kw, stride=stride,
                               Wrow=Wrow, Ho=Ho, Wo=Wo, Msup=Msup)

    flops = 2 * N * Ho * Wo * kh * kw * C * O
    bytes_accessed = (x_flat.size * 2 + wmat.size * 2 + bias_p.size * 4
                      + N * Ho * Wo * Opad * 4)

    out = pl.pallas_call(
        kernel,
        out_shape=jax.ShapeDtypeStruct((N, Ho, Wo, Opad), jnp.float32),
        grid=(N,),
        in_specs=[
            pl.BlockSpec((None, L, C), lambda n: (n, 0, 0)),            # image
            pl.BlockSpec((kh * kw * C, Opad), lambda n: (0, 0)),        # weights
            pl.BlockSpec((1, Opad), lambda n: (0, 0)),                  # bias
        ],
        out_specs=pl.BlockSpec((None, Ho, Wo, Opad), lambda n: (n, 0, 0, 0)),
        compiler_params=pltpu.CompilerParams(
            dimension_semantics=("parallel",)),
        cost_estimate=pl.CostEstimate(flops=flops, transcendentals=0,
                                      bytes_accessed=bytes_accessed),
    )(x_flat, wmat, bias_p)

    # Single boundary conversion back to NCHW, dropping channel padding.
    return jnp.transpose(out[..., :O], (0, 3, 1, 2))


# ---------------------------------------------------------------------------
if __name__ == "__main__":
    key = jax.random.PRNGKey(0)
    k_x, k_w, k_b, k_s = jax.random.split(key, 4)

    batch, in_channels, H, W = 2, 4, 16, 16
    out_channels = 8
    kernel_size = (3, 3)
    stride, padding = 1, 1

    x = jax.random.normal(k_x, (batch, in_channels, H, W), dtype=jnp.float32)
    weight_q = jax.random.randint(
        k_w, (out_channels, in_channels, kernel_size[0], kernel_size[1]),
        minval=-128, maxval=128, dtype=jnp.int32).astype(jnp.int8)
    bias = jax.random.normal(k_b, (out_channels,), dtype=jnp.float32) * 0.1
    scale = jax.random.uniform(k_s, (out_channels,), dtype=jnp.float32,
                               minval=0.01, maxval=0.05)
    zero_point = jnp.zeros((out_channels,), dtype=jnp.float32)

    out = conv_relu_forward(x, weight_q, bias, scale, zero_point,
                            stride=stride, padding=padding)
    out = jax.block_until_ready(out)

    # Pure-JAX reference using the same bf16 operand rounding the kernel feeds
    # the MXU (f32 accumulation), so the check isolates kernel correctness.
    fweight = (weight_q.astype(jnp.float32)
               - zero_point[:, None, None, None]) * scale[:, None, None, None]
    x_bf = x.astype(jnp.bfloat16).astype(jnp.float32)
    fw_bf = fweight.astype(jnp.bfloat16).astype(jnp.float32)
    ref = lax.conv_general_dilated(
        x_bf, fw_bf, window_strides=(stride, stride),
        padding=[(padding, padding), (padding, padding)],
        dimension_numbers=("NCHW", "OIHW", "NCHW"),
        preferred_element_type=jnp.float32)
    ref = jnp.maximum(ref + bias[None, :, None, None], 0.0)

    assert out.shape == (batch, out_channels, H, W), out.shape
    max_err = float(jnp.max(jnp.abs(out - ref)))
    assert jnp.allclose(out, ref, atol=2e-3, rtol=2e-3), max_err

    print("KERNEL_OK")
</pallas_src>

<mosaic_0001>
module attributes {stable_mosaic.version = 11 : i64} {
  func.func @_conv_relu_kernel(%arg0: i32, %arg1: memref<1x456x4xbf16, #tpu.memory_space<vmem>>, %arg2: memref<36x128xbf16, #tpu.memory_space<vmem>>, %arg3: memref<1x128xf32, #tpu.memory_space<vmem>>, %arg4: memref<1x16x16x128xf32, #tpu.memory_space<vmem>>) attributes {dimension_semantics = [#tpu.dimension_semantics<parallel>], iteration_bounds = array<i64: 2>, scalar_prefetch = 0 : i64, scratch_operands = 0 : i64, tpu.core_type = #tpu.core_type<tc>, window_params = [{transform_indices = @transform_0, window_bounds = array<i64: 1, 456, 4>}, {pipeline_mode = #tpu.pipeline_mode<synchronous>, transform_indices = @transform_1, window_bounds = array<i64: 36, 128>}, {pipeline_mode = #tpu.pipeline_mode<synchronous>, transform_indices = @transform_2, window_bounds = array<i64: 1, 128>}, {transform_indices = @transform_3, window_bounds = array<i64: 1, 16, 16, 128>}]} {
    %c0 = arith.constant 0 : index
    %c0_0 = arith.constant 0 : index
    %c0_1 = arith.constant 0 : index
    %0 = vector.load %arg1[%c0, %c0_0, %c0_1] : memref<1x456x4xbf16, #tpu.memory_space<vmem>>, vector<1x384x4xbf16>
    %1 = vector.shape_cast %0 : vector<1x384x4xbf16> to vector<384x4xbf16>
    %c0_2 = arith.constant 0 : index
    %c1 = arith.constant 1 : index
    %c0_3 = arith.constant 0 : index
    %2 = vector.load %arg1[%c0_2, %c1, %c0_3] : memref<1x456x4xbf16, #tpu.memory_space<vmem>>, vector<1x384x4xbf16>
    %3 = vector.shape_cast %2 : vector<1x384x4xbf16> to vector<384x4xbf16>
    %c0_4 = arith.constant 0 : index
    %c2 = arith.constant 2 : index
    %c0_5 = arith.constant 0 : index
    %4 = vector.load %arg1[%c0_4, %c2, %c0_5] : memref<1x456x4xbf16, #tpu.memory_space<vmem>>, vector<1x384x4xbf16>
    %5 = vector.shape_cast %4 : vector<1x384x4xbf16> to vector<384x4xbf16>
    %c0_6 = arith.constant 0 : index
    %c24 = arith.constant 24 : index
    %c0_7 = arith.constant 0 : index
    %6 = vector.load %arg1[%c0_6, %c24, %c0_7] : memref<1x456x4xbf16, #tpu.memory_space<vmem>>, vector<1x384x4xbf16>
    %7 = vector.shape_cast %6 : vector<1x384x4xbf16> to vector<384x4xbf16>
    %c0_8 = arith.constant 0 : index
    %c25 = arith.constant 25 : index
    %c0_9 = arith.constant 0 : index
    %8 = vector.load %arg1[%c0_8, %c25, %c0_9] : memref<1x456x4xbf16, #tpu.memory_space<vmem>>, vector<1x384x4xbf16>
    %9 = vector.shape_cast %8 : vector<1x384x4xbf16> to vector<384x4xbf16>
    %c0_10 = arith.constant 0 : index
    %c26 = arith.constant 26 : index
    %c0_11 = arith.constant 0 : index
    %10 = vector.load %arg1[%c0_10, %c26, %c0_11] : memref<1x456x4xbf16, #tpu.memory_space<vmem>>, vector<1x384x4xbf16>
    %11 = vector.shape_cast %10 : vector<1x384x4xbf16> to vector<384x4xbf16>
    %c0_12 = arith.constant 0 : index
    %c48 = arith.constant 48 : index
    %c0_13 = arith.constant 0 : index
    %12 = vector.load %arg1[%c0_12, %c48, %c0_13] : memref<1x456x4xbf16, #tpu.memory_space<vmem>>, vector<1x384x4xbf16>
    %13 = vector.shape_cast %12 : vector<1x384x4xbf16> to vector<384x4xbf16>
    %c0_14 = arith.constant 0 : index
    %c49 = arith.constant 49 : index
    %c0_15 = arith.constant 0 : index
    %14 = vector.load %arg1[%c0_14, %c49, %c0_15] : memref<1x456x4xbf16, #tpu.memory_space<vmem>>, vector<1x384x4xbf16>
    %15 = vector.shape_cast %14 : vector<1x384x4xbf16> to vector<384x4xbf16>
    %c0_16 = arith.constant 0 : index
    %c50 = arith.constant 50 : index
    %c0_17 = arith.constant 0 : index
    %16 = vector.load %arg1[%c0_16, %c50, %c0_17] : memref<1x456x4xbf16, #tpu.memory_space<vmem>>, vector<1x384x4xbf16>
    %17 = vector.shape_cast %16 : vector<1x384x4xbf16> to vector<384x4xbf16>
    %18 = tpu.concatenate %1, %3, %5, %7, %9, %11, %13, %15, %17 in 1 : vector<384x4xbf16>, vector<384x4xbf16>, vector<384x4xbf16>, vector<384x4xbf16>, vector<384x4xbf16>, vector<384x4xbf16>, vector<384x4xbf16>, vector<384x4xbf16>, vector<384x4xbf16> -> vector<384x36xbf16>
    %c0_18 = arith.constant 0 : index
    %c0_19 = arith.constant 0 : index
    %19 = vector.load %arg2[%c0_18, %c0_19] : memref<36x128xbf16, #tpu.memory_space<vmem>>, vector<36x128xbf16>
    %cst = arith.constant dense<0.000000e+00> : vector<384x128xf32>
    %20 = tpu.matmul %18, %19, %cst {dimension_numbers = #tpu.dot_dimension_numbers<[1], [0], [0], [1], [0, 0, 1, 1], [], []>} : vector<384x36xbf16>, vector<36x128xbf16>, vector<384x128xf32> -> vector<384x128xf32>
    %c0_20 = arith.constant 0 : index
    %c0_21 = arith.constant 0 : index
    %21 = vector.load %arg3[%c0_20, %c0_21] : memref<1x128xf32, #tpu.memory_space<vmem>>, vector<1x128xf32>
    %22 = vector.broadcast %21 : vector<1x128xf32> to vector<384x128xf32>
    %23 = arith.addf %20, %22 : vector<384x128xf32>
    %cst_22 = arith.constant 0.000000e+00 : f32
    %24 = vector.broadcast %cst_22 : f32 to vector<384x128xf32>
    %25 = arith.maximumf %23, %24 : vector<384x128xf32>
    %26 = vector.shape_cast %25 : vector<384x128xf32> to vector<16x24x128xf32>
    %27 = vector.extract_strided_slice %26 {offsets = [0, 0, 0], sizes = [16, 16, 128], strides = [1, 1, 1]} : vector<16x24x128xf32> to vector<16x16x128xf32>
    %c0_23 = arith.constant 0 : index
    %c0_24 = arith.constant 0 : index
    %c0_25 = arith.constant 0 : index
    %c0_26 = arith.constant 0 : index
    %28 = vector.load %arg4[%c0_23, %c0_24, %c0_25, %c0_26] : memref<1x16x16x128xf32, #tpu.memory_space<vmem>>, vector<1x16x16x128xf32>
    %29 = vector.shape_cast %28 : vector<1x16x16x128xf32> to vector<16x16x128xf32>
    %30 = vector.shape_cast %27 : vector<16x16x128xf32> to vector<1x16x16x128xf32>
    tpu.vector_store %arg4[%c0_23, %c0_24, %c0_25, %c0_26], %30 {strides = array<i32>} : memref<1x16x16x128xf32, #tpu.memory_space<vmem>>, vector<1x16x16x128xf32>,
    return
  }
  func.func @transform_0(%arg0: i32) -> (i32, i32, i32) {
    %c0_i32 = arith.constant 0 : i32
    %c0_i32_0 = arith.constant 0 : i32
    %c0_i32_1 = arith.constant 0 : i32
    return %arg0, %c0_i32, %c0_i32_0 : i32, i32, i32
  }
  func.func @transform_1(%arg0: i32) -> (i32, i32) {
    %c0_i32 = arith.constant 0 : i32
    %c0_i32_0 = arith.constant 0 : i32
    %c0_i32_1 = arith.constant 0 : i32
    return %c0_i32, %c0_i32_0 : i32, i32
  }
  func.func @transform_2(%arg0: i32) -> (i32, i32) {
    %c0_i32 = arith.constant 0 : i32
    %c0_i32_0 = arith.constant 0 : i32
    %c0_i32_1 = arith.constant 0 : i32
    return %c0_i32, %c0_i32_0 : i32, i32
  }
  func.func @transform_3(%arg0: i32) -> (i32, i32, i32, i32) {
    %c0_i32 = arith.constant 0 : i32
    %c0_i32_0 = arith.constant 0 : i32
    %c0_i32_1 = arith.constant 0 : i32
    %c0_i32_2 = arith.constant 0 : i32
    return %arg0, %c0_i32, %c0_i32_0, %c0_i32_1 : i32, i32, i32, i32
  }
}

</mosaic_0001>

<llo_original>
// kernel: conv_relu_forward.1
$region0: #{conv_relu_forward.1}
  #allocation0 [shape = 'u32[]', space=smem, size = 0x4, offset = 0x4, fixed_abs, tag = 'smem constant byte address 0x4 - core index']
  #allocation1 [shape = 'u32[144,128]{1,0:T(1,128)}', space=vmem, size = 0x12000, scoped, tag = 'internal scratch']
  %s0 = inlined_call_operand.vmem [shape: bf16[2,456,4], index: 0, kind: input, shape index: {}]
  %s1 = inlined_call_operand.vmem [shape: bf16[36,128], index: 1, kind: input, shape index: {}]
  %s2 = inlined_call_operand.vmem [shape: f32[1,128], index: 2, kind: input, shape index: {}]
  %s3 = inlined_call_operand.vmem [shape: f32[2,16,16,128], index: 3, kind: output, shape index: {}]
  %s4 = sld [smem:[#allocation0]]
  $region45: #{conv_relu_forward.1} parent=0
    _
  %s6 = ssub.s32 1, %s4
  %s7 = scalar_select 0, %s6, %s4
  loop: start=0, step=1, limit=4
  $region2: #{conv_relu_forward.1} parent=0 // loop_pre_header
    _
  $region3: #{conv_relu_forward.1} parent=0 // loop_header
    %s9 = sphi 0, %s13
    %p10 = scmp.ge.s32.totalorder %s9, 4
    %s19 = sphi 0, %s21
    %s22 = sphi 0, %s19
    %s23 = sphi 0, %s22
    %s39 = sphi 0, %s23
    %s43 = sphi 0, %s43
    %s45 = sphi 0, %s43
    %s46 = sphi 0, %s45
    %s60 = sphi 0, %s46
    %s64 = sphi 0, %s64
    %s66 = sphi 0, %s64
    %s67 = sphi 0, %s66
    %s81 = sphi 0, %s67
    %s87 = sphi 0, %s89
    %s90 = sphi 0, %s87
    %s91 = sphi 0, %s90
    %s107 = sphi 0, %s91
  $region4: #{conv_relu_forward.1} parent=0 // loop_header_branch
    %12 = sbr.rel (%p10) target = $region8
  $region5: #{conv_relu_forward.1} parent=0 // loop_body
    %s14 = ssub.s32 %s9, 1
    %s15 = ssub.s32 %s9, 2
    %s16 = sadd.s32 %s9, 1
    %s17 = ssub.s32 %s9, %s16
    %p18 = scmp.eq.s32.totalorder %s17, 0
    %s20 = sadd.s32 %s19, 1
    %s21 = scalar_select %p18, %s19, %s20
    %p24 = pneg %p18
    %p25 = scmp.eq.s32.totalorder %s9, 1
    %p26 = por %p24, %p25
    %p27 = scmp.ne.s32.totalorder %s19, %s22
    %p28 = scmp.eq.s32.totalorder %s9, 0
    %p29 = por %p27, %p28
    %p30 = scmp.ne.s32.totalorder %s19, %s22
    %p31 = scmp.eq.s32.totalorder %s14, 1
    %p32 = por %p30, %p31
    %p33 = scmp.ne.s32.totalorder %s22, %s23
    %p34 = scmp.eq.s32.totalorder %s14, 0
    %p35 = por %p33, %p34
    %p36 = scmp.ne.s32.totalorder %s22, %s23
    %p37 = scmp.eq.s32.totalorder %s15, 1
    %p38 = por %p36, %p37
    %p40 = scmp.ne.s32.totalorder %s23, %s39
    %p41 = scmp.eq.s32.totalorder %s15, 0
    %p42 = por %p40, %p41
    %s44 = sadd.s32 %s43, 1
    %p47 = scmp.eq.s32.totalorder %s9, 1
    %p48 = scmp.ne.s32.totalorder %s43, %s45
    %p49 = scmp.eq.s32.totalorder %s9, 0
    %p50 = por %p48, %p49
    %p51 = scmp.ne.s32.totalorder %s43, %s45
    %p52 = scmp.eq.s32.totalorder %s14, 1
    %p53 = por %p51, %p52
    %p54 = scmp.ne.s32.totalorder %s45, %s46
    %p55 = scmp.eq.s32.totalorder %s14, 0
    %p56 = por %p54, %p55
    %p57 = scmp.ne.s32.totalorder %s45, %s46
    %p58 = scmp.eq.s32.totalorder %s15, 1
    %p59 = por %p57, %p58
    %p61 = scmp.ne.s32.totalorder %s46, %s60
    %p62 = scmp.eq.s32.totalorder %s15, 0
    %p63 = por %p61, %p62
    %s65 = sadd.s32 %s64, 1
    %p68 = scmp.eq.s32.totalorder %s9, 1
    %p69 = scmp.ne.s32.totalorder %s64, %s66
    %p70 = scmp.eq.s32.totalorder %s9, 0
    %p71 = por %p69, %p70
    %p72 = scmp.ne.s32.totalorder %s64, %s66
    %p73 = scmp.eq.s32.totalorder %s14, 1
    %p74 = por %p72, %p73
    %p75 = scmp.ne.s32.totalorder %s66, %s67
    %p76 = scmp.eq.s32.totalorder %s14, 0
    %p77 = por %p75, %p76
    %p78 = scmp.ne.s32.totalorder %s66, %s67
    %p79 = scmp.eq.s32.totalorder %s15, 1
    %p80 = por %p78, %p79
    %p82 = scmp.ne.s32.totalorder %s67, %s81
    %p83 = scmp.eq.s32.totalorder %s15, 0
    %p84 = por %p82, %p83
    %s85 = ssub.s32 %s9, %s16
    %p86 = scmp.eq.s32.totalorder %s85, 0
    %s88 = sadd.s32 %s87, 1
    %s89 = scalar_select %p86, %s87, %s88
    %p92 = pneg %p86
    %p93 = scmp.eq.s32.totalorder %s9, 1
    %p94 = por %p92, %p93
    %p95 = scmp.ne.s32.totalorder %s87, %s90
    %p96 = scmp.eq.s32.totalorder %s9, 0
    %p97 = por %p95, %p96
    %p98 = scmp.ne.s32.totalorder %s87, %s90
    %p99 = scmp.eq.s32.totalorder %s14, 1
    %p100 = por %p98, %p99
    %p101 = scmp.ne.s32.totalorder %s90, %s91
    %p102 = scmp.eq.s32.totalorder %s14, 0
    %p103 = por %p101, %p102
    %p104 = scmp.ne.s32.totalorder %s90, %s91
    %p105 = scmp.eq.s32.totalorder %s15, 1
    %p106 = por %p104, %p105
    %p108 = scmp.ne.s32.totalorder %s91, %s107
    %p109 = scmp.eq.s32.totalorder %s15, 0
    %p110 = por %p108, %p109
    %p111 = scmp.le.s32.totalorder 1, %s9
    %p112 = scmp.lt.s32.totalorder %s9, 3
    %p113 = pnand %p111, %p112
    %p114 = pneg %p113
    // Predicated region
    $region9: #{conv_relu_forward.1} parent=5 // pred_check
      _
    $region10: #{conv_relu_forward.1} parent=5 // pred_check_branch
      %116 = sbr.rel (%p113) target = $region12
    $region11: #{conv_relu_forward.1} parent=5 // pred_region
      %s117 = ssub.s32 %s9, 1
      // Predicated region
      $region13: #{conv_relu_forward.1} parent=11 // pred_check
        %p118 = pneg %p56
      $region14: #{conv_relu_forward.1} parent=11 // pred_check_branch
        %120 = sbr.rel (%p118) target = $region16
      $region15: #{conv_relu_forward.1} parent=11 // pred_region
        _
      $region16: #{conv_relu_forward.1} parent=11 // pred_fallthru
        _
      // Predicated region
      $region17: #{conv_relu_forward.1} parent=11 // pred_check
        %p121 = pneg %p77
      $region18: #{conv_relu_forward.1} parent=11 // pred_check_branch
        %123 = sbr.rel (%p121) target = $region20
      $region19: #{conv_relu_forward.1} parent=11 // pred_region
        _
      $region20: #{conv_relu_forward.1} parent=11 // pred_fallthru
        _
    $region12: #{conv_relu_forward.1} parent=5 // pred_fallthru
      _
    %p124 = scmp.lt.s32.totalorder %s9, 2
    // Predicated region
    $region21: #{conv_relu_forward.1} parent=5 // pred_check
      %p125 = pneg %p124
    $region22: #{conv_relu_forward.1} parent=5 // pred_check_branch
      %127 = sbr.rel (%p125) target = $region24
    $region23: #{conv_relu_forward.1} parent=5 // pred_region
      // Predicated region
      $region25: #{conv_relu_forward.1} parent=23 // pred_check
        %p128 = pneg %p29
      $region26: #{conv_relu_forward.1} parent=23 // pred_check_branch
        %130 = sbr.rel (%p128) target = $region28
      $region27: #{conv_relu_forward.1} parent=23 // pred_region
        %p131 = scmp.lt.s32.totalorder %s9, 1
        %s132 = scalar_select %p131, %s9, 1
        %s133 = smul.addr %s132, 57
        %s134 = smul.addr %s133, 4
        %s135 = scalar_lea.vmem %s0, %s134
      $region28: #{conv_relu_forward.1} parent=23 // pred_fallthru
        _
    $region24: #{conv_relu_forward.1} parent=5 // pred_fallthru
      _
    %p136 = scmp.le.s32.totalorder 1, %s9
    %p137 = scmp.lt.s32.totalorder %s9, 3
    %p138 = pnand %p136, %p137
    %p139 = pneg %p138
    // Predicated region
    $region29: #{conv_relu_forward.1} parent=5 // pred_check
      _
    $region30: #{conv_relu_forward.1} parent=5 // pred_check_branch
      %141 = sbr.rel (%p138) target = $region32
    $region31: #{conv_relu_forward.1} parent=5 // pred_region
      %s142 = ssub.s32 %s9, 1
      %p143 = scmp.lt.s32.totalorder %s14, 1
      %s144 = scalar_select %p143, %s14, 1
      %s145 = smul.addr %s144, 57
      %s146 = smul.addr %s145, 4
      %s147 = scalar_lea.vmem %s0, %s146
      %p148 = pneg %p35
      %p149 = pneg %p32
      %p150 = pneg %p56
      %p151 = pneg %p53
      %p152 = pneg %p77
      %p153 = pneg %p74
      %p154 = pneg %p103
      %p155 = pneg %p100
      %p156 = scmp.lt.s32.totalorder %s14, 1
      %s157 = scalar_select %p156, %s14, 1
      %s158 = smul.addr %s157, 32
      %s159 = smul.addr %s158, 8
      %s160 = scalar_lea.vmem %s3, %s159
      %p161 = scmp.lt.s32.totalorder %s14, 1
      %s162 = scalar_select %p161, %s14, 1
      %s163 = smul.addr %s162, 57
      %s164 = smul.addr %s163, 4
      %s165 = scalar_lea.vmem %s0, %s164
      %p166 = scmp.lt.s32.totalorder %s14, 1
      %s167 = scalar_select %p166, %s14, 1
      %s168 = smul.addr %s167, 32
      %s169 = smul.addr %s168, 8
      %s170 = scalar_lea.vmem %s3, %s169
      %v172 = vld [vmem:[%s165] sm:$0xf]
      %v173 = vld [vmem:[%s165 + $0x4] sm:$0xf]
      %v174 = vld [vmem:[%s165 + $0x8] sm:$0xf]
      %v175 = vld [vmem:[%s165 + $0xc] sm:$0xf]
      %v176 = vld [vmem:[%s165 + $0x10] sm:$0xf]
      %v177 = vld [vmem:[%s165 + $0x14] sm:$0xf]
      %v178 = vld [vmem:[%s165 + $0x18] sm:$0xf]
      %v179 = vld [vmem:[%s165 + $0x1c] sm:$0xf]
      %v180 = vld [vmem:[%s165 + $0x20] sm:$0xf]
      %v181 = vld [vmem:[%s165 + $0x24] sm:$0xf]
      %v182 = vld [vmem:[%s165 + $0x28] sm:$0xf]
      %v183 = vld [vmem:[%s165 + $0x2c] sm:$0xf]
      %v184 = vld [vmem:[%s165 + $0x30] sm:$0xf]
      %v185 = vld [vmem:[%s165 + $0x34] sm:$0xf]
      %v186 = vld [vmem:[%s165 + $0x38] sm:$0xf]
      %v187 = vld [vmem:[%s165 + $0x3c] sm:$0xf]
      %v188 = vld [vmem:[%s165 + $0x40] sm:$0xf]
      %v189 = vld [vmem:[%s165 + $0x44] sm:$0xf]
      %v190 = vld [vmem:[%s165 + $0x48] sm:$0xf]
      %v191 = vld [vmem:[%s165 + $0x4c] sm:$0xf]
      %v192 = vld [vmem:[%s165 + $0x50] sm:$0xf]
      %v193 = vld [vmem:[%s165 + $0x54] sm:$0xf]
      %v194 = vld [vmem:[%s165 + $0x58] sm:$0xf]
      %v195 = vld [vmem:[%s165 + $0x5c] sm:$0xf]
      %v196 = vld [vmem:[%s165 + $0x60] sm:$0xf]
      %v197 = vld [vmem:[%s165 + $0x64] sm:$0xf]
      %v198 = vld [vmem:[%s165 + $0x68] sm:$0xf]
      %v199 = vld [vmem:[%s165 + $0x6c] sm:$0xf]
      %v200 = vld [vmem:[%s165 + $0x70] sm:$0xf]
      %v201 = vld [vmem:[%s165 + $0x74] sm:$0xf]
      %v202 = vld [vmem:[%s165 + $0x78] sm:$0xf]
      %v203 = vld [vmem:[%s165 + $0x7c] sm:$0xf]
      %v204 = vld [vmem:[%s165 + $0x80] sm:$0xf]
      %v205 = vld [vmem:[%s165 + $0x84] sm:$0xf]
      %v206 = vld [vmem:[%s165 + $0x88] sm:$0xf]
      %v207 = vld [vmem:[%s165 + $0x8c] sm:$0xf]
      %v208 = vld [vmem:[%s165 + $0x90] sm:$0xf]
      %v209 = vld [vmem:[%s165 + $0x94] sm:$0xf]
      %v210 = vld [vmem:[%s165 + $0x98] sm:$0xf]
      %v211 = vld [vmem:[%s165 + $0x9c] sm:$0xf]
      %v212 = vld [vmem:[%s165 + $0xa0] sm:$0xf]
      %v213 = vld [vmem:[%s165 + $0xa4] sm:$0xf]
      %v214 = vld [vmem:[%s165 + $0xa8] sm:$0xf]
      %v215 = vld [vmem:[%s165 + $0xac] sm:$0xf]
      %v216 = vld [vmem:[%s165 + $0xb0] sm:$0xf]
      %v217 = vld [vmem:[%s165 + $0xb4] sm:$0xf]
      %v218 = vld [vmem:[%s165 + $0xb8] sm:$0xf]
      %v219 = vld [vmem:[%s165 + $0xbc] sm:$0xf]
      %v220 = vld [vmem:[%s165 + $0xc0] sm:$0x1]
      %v221 = vld [vmem:[%s165] sm:$0xe]
      %v222 = vld [vmem:[%s165 + $0xc0] sm:$0xf]
      %v223 = vld [vmem:[%s165 + $0xc4] sm:$0xf]
      %v224 = vld [vmem:[%s165 + $0xc8] sm:$0xf]
      %v225 = vld [vmem:[%s165 + $0xcc] sm:$0x1]
      %v226 = vld [vmem:[%s165 + $0xc] sm:$0xe]
      %v227 = vld [vmem:[%s165 + $0xcc] sm:$0xf]
      %v228 = vld [vmem:[%s165 + $0xd0] sm:$0xf]
      %v229 = vld [vmem:[%s165 + $0xd4] sm:$0xf]
      %v230 = vld [vmem:[%s165 + $0xd8] sm:$0x1]
      %v231 = vld [vmem:[%s165 + $0x18] sm:$0xe]
      %v280 = vunpack.c.l.b16 %v172
      %v281 = vunpack.c.l.b16 %v173
      %v282 = vunpack.c.l.b16 %v174
      %v283 = vunpack.c.l.b16 %v175
      %v284 = vunpack.c.l.b16 %v176
      %v285 = vunpack.c.l.b16 %v177
      %v286 = vunpack.c.l.b16 %v178
      %v287 = vunpack.c.l.b16 %v179
      %v288 = vunpack.c.l.b16 %v180
      %v289 = vunpack.c.l.b16 %v181
      %v290 = vunpack.c.l.b16 %v182
      %v291 = vunpack.c.l.b16 %v183
      %v292 = vunpack.c.l.b16 %v184
      %v293 = vunpack.c.l.b16 %v185
      %v294 = vunpack.c.l.b16 %v186
      %v295 = vunpack.c.l.b16 %v187
      %v296 = vunpack.c.l.b16 %v188
      %v297 = vunpack.c.l.b16 %v189
      %v298 = vunpack.c.l.b16 %v190
      %v299 = vunpack.c.l.b16 %v191
      %v300 = vunpack.c.l.b16 %v192
      %v301 = vunpack.c.l.b16 %v193
      %v302 = vunpack.c.l.b16 %v194
      %v303 = vunpack.c.l.b16 %v195
      %v304 = vunpack.c.l.b16 %v196
      %v305 = vunpack.c.l.b16 %v197
      %v306 = vunpack.c.l.b16 %v198
      %v307 = vunpack.c.l.b16 %v199
      %v308 = vunpack.c.l.b16 %v200
      %v309 = vunpack.c.l.b16 %v201
      %v310 = vunpack.c.l.b16 %v202
      %v311 = vunpack.c.l.b16 %v203
      %v312 = vunpack.c.l.b16 %v204
      %v313 = vunpack.c.l.b16 %v205
      %v314 = vunpack.c.l.b16 %v206
      %v315 = vunpack.c.l.b16 %v207
      %v316 = vunpack.c.l.b16 %v208
      %v317 = vunpack.c.l.b16 %v209
      %v318 = vunpack.c.l.b16 %v210
      %v319 = vunpack.c.l.b16 %v211
      %v320 = vunpack.c.l.b16 %v212
      %v321 = vunpack.c.l.b16 %v213
      %v322 = vunpack.c.l.b16 %v214
      %v323 = vunpack.c.l.b16 %v215
      %v324 = vunpack.c.l.b16 %v216
      %v325 = vunpack.c.l.b16 %v217
      %v326 = vunpack.c.l.b16 %v218
      %v327 = vunpack.c.l.b16 %v219
      %v328 = vpack.c.b16 %v281, %v280
      %v329 = vpack.c.b16 %v283, %v282
      %v330 = vpack.c.b16 %v285, %v284
      %v331 = vpack.c.b16 %v287, %v286
      %v332 = vpack.c.b16 %v289, %v288
      %v333 = vpack.c.b16 %v291, %v290
      %v334 = vpack.c.b16 %v293, %v292
      %v335 = vpack.c.b16 %v295, %v294
      %v336 = vpack.c.b16 %v297, %v296
      %v337 = vpack.c.b16 %v299, %v298
      %v338 = vpack.c.b16 %v301, %v300
      %v339 = vpack.c.b16 %v303, %v302
      %v340 = vpack.c.b16 %v305, %v304
      %v341 = vpack.c.b16 %v307, %v306
      %v342 = vpack.c.b16 %v309, %v308
      %v343 = vpack.c.b16 %v311, %v310
      %v344 = vpack.c.b16 %v313, %v312
      %v345 = vpack.c.b16 %v315, %v314
      %v346 = vpack.c.b16 %v317, %v316
      %v347 = vpack.c.b16 %v319, %v318
      %v348 = vpack.c.b16 %v321, %v320
      %v349 = vpack.c.b16 %v323, %v322
      %v350 = vpack.c.b16 %v325, %v324
      %v351 = vpack.c.b16 %v327, %v326
      %v353 = vunpack.c.l.b16 %v220
      %v354 = vpack.c.b16 %v353, %v353
      %vm355 = vsmask.f32 7424
      %v357 = vshrl.u32 %v328, 16
      %v359 = vshll.u32 %v328, 16
      %v361 = vrot.slane %v359, 1
      %v362 = vor.u32 %v357, %v361
      %v364 = vshll.u32 %v329, 16
      %v366 = vrot.slane %v364, 1
      %v367 = vsel %vm355, %v362, %v366
      %v368 = vshrl.u32 %v329, 16
      %v370 = vor.u32 %v368, %v366
      %v372 = vshll.u32 %v330, 16
      %v374 = vrot.slane %v372, 1
      %v375 = vsel %vm355, %v370, %v374
      %v376 = vshrl.u32 %v330, 16
      %v378 = vor.u32 %v376, %v374
      %v380 = vshll.u32 %v331, 16
      %v382 = vrot.slane %v380, 1
      %v383 = vsel %vm355, %v378, %v382
      %v384 = vshrl.u32 %v331, 16
      %v386 = vor.u32 %v384, %v382
      %v388 = vshll.u32 %v332, 16
      %v390 = vrot.slane %v388, 1
      %v391 = vsel %vm355, %v386, %v390
      %v392 = vshrl.u32 %v332, 16
      %v394 = vor.u32 %v392, %v390
      %v396 = vshll.u32 %v333, 16
      %v398 = vrot.slane %v396, 1
      %v399 = vsel %vm355, %v394, %v398
      %v400 = vshrl.u32 %v333, 16
      %v402 = vor.u32 %v400, %v398
      %v404 = vshll.u32 %v334, 16
      %v406 = vrot.slane %v404, 1
      %v407 = vsel %vm355, %v402, %v406
      %v408 = vshrl.u32 %v334, 16
      %v410 = vor.u32 %v408, %v406
      %v412 = vshll.u32 %v335, 16
      %v414 = vrot.slane %v412, 1
      %v415 = vsel %vm355, %v410, %v414
      %v416 = vshrl.u32 %v335, 16
      %v418 = vor.u32 %v416, %v414
      %v420 = vshll.u32 %v336, 16
      %v422 = vrot.slane %v420, 1
      %v423 = vsel %vm355, %v418, %v422
      %v424 = vshrl.u32 %v336, 16
      %v426 = vor.u32 %v424, %v422
      %v428 = vshll.u32 %v337, 16
      %v430 = vrot.slane %v428, 1
      %v431 = vsel %vm355, %v426, %v430
      %v432 = vshrl.u32 %v337, 16
      %v434 = vor.u32 %v432, %v430
      %v436 = vshll.u32 %v338, 16
      %v438 = vrot.slane %v436, 1
      %v439 = vsel %vm355, %v434, %v438
      %v440 = vshrl.u32 %v338, 16
      %v442 = vor.u32 %v440, %v438
      %v444 = vshll.u32 %v339, 16
      %v446 = vrot.slane %v444, 1
      %v447 = vsel %vm355, %v442, %v446
      %v448 = vshrl.u32 %v339, 16
      %v450 = vor.u32 %v448, %v446
      %v452 = vshll.u32 %v340, 16
      %v454 = vrot.slane %v452, 1
      %v455 = vsel %vm355, %v450, %v454
      %v456 = vshrl.u32 %v340, 16
      %v458 = vor.u32 %v456, %v454
      %v460 = vshll.u32 %v341, 16
      %v462 = vrot.slane %v460, 1
      %v463 = vsel %vm355, %v458, %v462
      %v464 = vshrl.u32 %v341, 16
      %v466 = vor.u32 %v464, %v462
      %v468 = vshll.u32 %v342, 16
      %v470 = vrot.slane %v468, 1
      %v471 = vsel %vm355, %v466, %v470
      %v472 = vshrl.u32 %v342, 16
      %v474 = vor.u32 %v472, %v470
      %v476 = vshll.u32 %v343, 16
      %v478 = vrot.slane %v476, 1
      %v479 = vsel %vm355, %v474, %v478
      %v480 = vshrl.u32 %v343, 16
      %v482 = vor.u32 %v480, %v478
      %v484 = vshll.u32 %v344, 16
      %v486 = vrot.slane %v484, 1
      %v487 = vsel %vm355, %v482, %v486
      %v488 = vshrl.u32 %v344, 16
      %v490 = vor.u32 %v488, %v486
      %v492 = vshll.u32 %v345, 16
      %v494 = vrot.slane %v492, 1
      %v495 = vsel %vm355, %v490, %v494
      %v496 = vshrl.u32 %v345, 16
      %v498 = vor.u32 %v496, %v494
      %v500 = vshll.u32 %v346, 16
      %v502 = vrot.slane %v500, 1
      %v503 = vsel %vm355, %v498, %v502
      %v504 = vshrl.u32 %v346, 16
      %v506 = vor.u32 %v504, %v502
      %v508 = vshll.u32 %v347, 16
      %v510 = vrot.slane %v508, 1
      %v511 = vsel %vm355, %v506, %v510
      %v512 = vshrl.u32 %v347, 16
      %v514 = vor.u32 %v512, %v510
      %v516 = vshll.u32 %v348, 16
      %v518 = vrot.slane %v516, 1
      %v519 = vsel %vm355, %v514, %v518
      %v520 = vshrl.u32 %v348, 16
      %v522 = vor.u32 %v520, %v518
      %v524 = vshll.u32 %v349, 16
      %v526 = vrot.slane %v524, 1
      %v527 = vsel %vm355, %v522, %v526
      %v528 = vshrl.u32 %v349, 16
      %v530 = vor.u32 %v528, %v526
      %v532 = vshll.u32 %v350, 16
      %v534 = vrot.slane %v532, 1
      %v535 = vsel %vm355, %v530, %v534
      %v536 = vshrl.u32 %v350, 16
      %v538 = vor.u32 %v536, %v534
      %v540 = vshll.u32 %v351, 16
      %v542 = vrot.slane %v540, 1
      %v543 = vsel %vm355, %v538, %v542
      %v544 = vshrl.u32 %v351, 16
      %v546 = vor.u32 %v544, %v542
      %v548 = vshll.u32 %v354, 16
      %v550 = vrot.slane %v548, 1
      %v551 = vsel %vm355, %v546, %v550
      %552 = vrot.lane.b32.xlu0 %v367, 4
      %v553 = vpop.permute.xlu0 %552
      %554 = vrot.lane.b32.xlu0 %v375, 4
      %v555 = vpop.permute.xlu0 %554
      %556 = vrot.lane.b32.xlu0 %v383, 4
      %v557 = vpop.permute.xlu0 %556
      %558 = vrot.lane.b32.xlu0 %v391, 4
      %v559 = vpop.permute.xlu0 %558
      %560 = vrot.lane.b32.xlu0 %v399, 4
      %v561 = vpop.permute.xlu0 %560
      %562 = vrot.lane.b32.xlu0 %v407, 4
      %v563 = vpop.permute.xlu0 %562
      %564 = vrot.lane.b32.xlu0 %v415, 4
      %v565 = vpop.permute.xlu0 %564
      %566 = vrot.lane.b32.xlu0 %v423, 4
      %v567 = vpop.permute.xlu0 %566
      %568 = vrot.lane.b32.xlu0 %v431, 4
      %v569 = vpop.permute.xlu0 %568
      %570 = vrot.lane.b32.xlu0 %v439, 4
      %v571 = vpop.permute.xlu0 %570
      %572 = vrot.lane.b32.xlu0 %v447, 4
      %v573 = vpop.permute.xlu0 %572
      %574 = vrot.lane.b32.xlu0 %v455, 4
      %v575 = vpop.permute.xlu0 %574
      %576 = vrot.lane.b32.xlu0 %v463, 4
      %v577 = vpop.permute.xlu0 %576
      %578 = vrot.lane.b32.xlu0 %v471, 4
      %v579 = vpop.permute.xlu0 %578
      %580 = vrot.lane.b32.xlu0 %v479, 4
      %v581 = vpop.permute.xlu0 %580
      %582 = vrot.lane.b32.xlu0 %v487, 4
      %v583 = vpop.permute.xlu0 %582
      %584 = vrot.lane.b32.xlu0 %v495, 4
      %v585 = vpop.permute.xlu0 %584
      %586 = vrot.lane.b32.xlu0 %v503, 4
      %v587 = vpop.permute.xlu0 %586
      %588 = vrot.lane.b32.xlu0 %v511, 4
      %v589 = vpop.permute.xlu0 %588
      %590 = vrot.lane.b32.xlu0 %v519, 4
      %v591 = vpop.permute.xlu0 %590
      %592 = vrot.lane.b32.xlu0 %v527, 4
      %v593 = vpop.permute.xlu0 %592
      %594 = vrot.lane.b32.xlu0 %v535, 4
      %v595 = vpop.permute.xlu0 %594
      %596 = vrot.lane.b32.xlu0 %v543, 4
      %v597 = vpop.permute.xlu0 %596
      %598 = vrot.lane.b32.xlu0 %v551, 4
      %v599 = vpop.permute.xlu0 %598
      %v601 = vunpack.c.l.b16 %v221
      %v602 = vpack.c.b16 %v281, %v601
      %vm603 = vcmask 1046528
      %v604 = vrot.slane %v602, 1
      %v605 = vrot.slane %v329, 1
      %v606 = vsel %vm603, %v604, %v605
      %v607 = vrot.slane %v330, 1
      %v608 = vsel %vm603, %v605, %v607
      %v609 = vrot.slane %v331, 1
      %v610 = vsel %vm603, %v607, %v609
      %v611 = vrot.slane %v332, 1
      %v612 = vsel %vm603, %v609, %v611
      %v613 = vrot.slane %v333, 1
      %v614 = vsel %vm603, %v611, %v613
      %v615 = vrot.slane %v334, 1
      %v616 = vsel %vm603, %v613, %v615
      %v617 = vrot.slane %v335, 1
      %v618 = vsel %vm603, %v615, %v617
      %v619 = vrot.slane %v336, 1
      %v620 = vsel %vm603, %v617, %v619
      %v621 = vrot.slane %v337, 1
      %v622 = vsel %vm603, %v619, %v621
      %v623 = vrot.slane %v338, 1
      %v624 = vsel %vm603, %v621, %v623
      %v625 = vrot.slane %v339, 1
      %v626 = vsel %vm603, %v623, %v625
      %v627 = vrot.slane %v340, 1
      %v628 = vsel %vm603, %v625, %v627
      %v629 = vrot.slane %v341, 1
      %v630 = vsel %vm603, %v627, %v629
      %v631 = vrot.slane %v342, 1
      %v632 = vsel %vm603, %v629, %v631
      %v633 = vrot.slane %v343, 1
      %v634 = vsel %vm603, %v631, %v633
      %v635 = vrot.slane %v344, 1
      %v636 = vsel %vm603, %v633, %v635
      %v637 = vrot.slane %v345, 1
      %v638 = vsel %vm603, %v635, %v637
      %v639 = vrot.slane %v346, 1
      %v640 = vsel %vm603, %v637, %v639
      %v641 = vrot.slane %v347, 1
      %v642 = vsel %vm603, %v639, %v641
      %v643 = vrot.slane %v348, 1
      %v644 = vsel %vm603, %v641, %v643
      %v645 = vrot.slane %v349, 1
      %v646 = vsel %vm603, %v643, %v645
      %v647 = vrot.slane %v350, 1
      %v648 = vsel %vm603, %v645, %v647
      %v649 = vrot.slane %v351, 1
      %v650 = vsel %vm603, %v647, %v649
      %v651 = vrot.slane %v354, 1
      %v652 = vsel %vm603, %v649, %v651
      %653 = vrot.lane.b32.xlu0 %v606, 8
      %v654 = vpop.permute.xlu0 %653
      %655 = vrot.lane.b32.xlu0 %v608, 8
      %v656 = vpop.permute.xlu0 %655
      %657 = vrot.lane.b32.xlu0 %v610, 8
      %v658 = vpop.permute.xlu0 %657
      %659 = vrot.lane.b32.xlu0 %v612, 8
      %v660 = vpop.permute.xlu0 %659
      %661 = vrot.lane.b32.xlu0 %v614, 8
      %v662 = vpop.permute.xlu0 %661
      %663 = vrot.lane.b32.xlu0 %v616, 8
      %v664 = vpop.permute.xlu0 %663
      %665 = vrot.lane.b32.xlu0 %v618, 8
      %v666 = vpop.permute.xlu0 %665
      %667 = vrot.lane.b32.xlu0 %v620, 8
      %v668 = vpop.permute.xlu0 %667
      %669 = vrot.lane.b32.xlu0 %v622, 8
      %v670 = vpop.permute.xlu0 %669
      %671 = vrot.lane.b32.xlu0 %v624, 8
      %v672 = vpop.permute.xlu0 %671
      %673 = vrot.lane.b32.xlu0 %v626, 8
      %v674 = vpop.permute.xlu0 %673
      %675 = vrot.lane.b32.xlu0 %v628, 8
      %v676 = vpop.permute.xlu0 %675
      %677 = vrot.lane.b32.xlu0 %v630, 8
      %v678 = vpop.permute.xlu0 %677
      %679 = vrot.lane.b32.xlu0 %v632, 8
      %v680 = vpop.permute.xlu0 %679
      %681 = vrot.lane.b32.xlu0 %v634, 8
      %v682 = vpop.permute.xlu0 %681
      %683 = vrot.lane.b32.xlu0 %v636, 8
      %v684 = vpop.permute.xlu0 %683
      %685 = vrot.lane.b32.xlu0 %v638, 8
      %v686 = vpop.permute.xlu0 %685
      %687 = vrot.lane.b32.xlu0 %v640, 8
      %v688 = vpop.permute.xlu0 %687
      %689 = vrot.lane.b32.xlu0 %v642, 8
      %v690 = vpop.permute.xlu0 %689
      %691 = vrot.lane.b32.xlu0 %v644, 8
      %v692 = vpop.permute.xlu0 %691
      %693 = vrot.lane.b32.xlu0 %v646, 8
      %v694 = vpop.permute.xlu0 %693
      %695 = vrot.lane.b32.xlu0 %v648, 8
      %v696 = vpop.permute.xlu0 %695
      %697 = vrot.lane.b32.xlu0 %v650, 8
      %v698 = vpop.permute.xlu0 %697
      %699 = vrot.lane.b32.xlu0 %v652, 8
      %v700 = vpop.permute.xlu0 %699
      %v704 = vunpack.c.l.b16 %v222
      %v705 = vunpack.c.l.b16 %v223
      %v706 = vunpack.c.l.b16 %v224
      %v707 = vpack.c.b16 %v284, %v283
      %v708 = vpack.c.b16 %v286, %v285
      %v709 = vpack.c.b16 %v288, %v287
      %v710 = vpack.c.b16 %v290, %v289
      %v711 = vpack.c.b16 %v292, %v291
      %v712 = vpack.c.b16 %v294, %v293
      %v713 = vpack.c.b16 %v296, %v295
      %v714 = vpack.c.b16 %v298, %v297
      %v715 = vpack.c.b16 %v300, %v299
      %v716 = vpack.c.b16 %v302, %v301
      %v717 = vpack.c.b16 %v304, %v303
      %v718 = vpack.c.b16 %v306, %v305
      %v719 = vpack.c.b16 %v308, %v307
      %v720 = vpack.c.b16 %v310, %v309
      %v721 = vpack.c.b16 %v312, %v311
      %v722 = vpack.c.b16 %v314, %v313
      %v723 = vpack.c.b16 %v316, %v315
      %v724 = vpack.c.b16 %v318, %v317
      %v725 = vpack.c.b16 %v320, %v319
      %v726 = vpack.c.b16 %v322, %v321
      %v727 = vpack.c.b16 %v324, %v323
      %v728 = vpack.c.b16 %v326, %v325
      %v729 = vpack.c.b16 %v704, %v327
      %v730 = vpack.c.b16 %v706, %v705
      %731 = vrot.lane.b32.xlu0 %v707, 12
      %v732 = vpop.permute.xlu0 %731
      %733 = vrot.lane.b32.xlu0 %v708, 12
      %v734 = vpop.permute.xlu0 %733
      %735 = vrot.lane.b32.xlu0 %v709, 12
      %v736 = vpop.permute.xlu0 %735
      %737 = vrot.lane.b32.xlu0 %v710, 12
      %v738 = vpop.permute.xlu0 %737
      %739 = vrot.lane.b32.xlu0 %v711, 12
      %v740 = vpop.permute.xlu0 %739
      %741 = vrot.lane.b32.xlu0 %v712, 12
      %v742 = vpop.permute.xlu0 %741
      %743 = vrot.lane.b32.xlu0 %v713, 12
      %v744 = vpop.permute.xlu0 %743
      %745 = vrot.lane.b32.xlu0 %v714, 12
      %v746 = vpop.permute.xlu0 %745
      %747 = vrot.lane.b32.xlu0 %v715, 12
      %v748 = vpop.permute.xlu0 %747
      %749 = vrot.lane.b32.xlu0 %v716, 12
      %v750 = vpop.permute.xlu0 %749
      %751 = vrot.lane.b32.xlu0 %v717, 12
      %v752 = vpop.permute.xlu0 %751
      %753 = vrot.lane.b32.xlu0 %v718, 12
      %v754 = vpop.permute.xlu0 %753
      %755 = vrot.lane.b32.xlu0 %v719, 12
      %v756 = vpop.permute.xlu0 %755
      %757 = vrot.lane.b32.xlu0 %v720, 12
      %v758 = vpop.permute.xlu0 %757
      %759 = vrot.lane.b32.xlu0 %v721, 12
      %v760 = vpop.permute.xlu0 %759
      %761 = vrot.lane.b32.xlu0 %v722, 12
      %v762 = vpop.permute.xlu0 %761
      %763 = vrot.lane.b32.xlu0 %v723, 12
      %v764 = vpop.permute.xlu0 %763
      %765 = vrot.lane.b32.xlu0 %v724, 12
      %v766 = vpop.permute.xlu0 %765
      %767 = vrot.lane.b32.xlu0 %v725, 12
      %v768 = vpop.permute.xlu0 %767
      %769 = vrot.lane.b32.xlu0 %v726, 12
      %v770 = vpop.permute.xlu0 %769
      %771 = vrot.lane.b32.xlu0 %v727, 12
      %v772 = vpop.permute.xlu0 %771
      %773 = vrot.lane.b32.xlu0 %v728, 12
      %v774 = vpop.permute.xlu0 %773
      %775 = vrot.lane.b32.xlu0 %v729, 12
      %v776 = vpop.permute.xlu0 %775
      %777 = vrot.lane.b32.xlu0 %v730, 12
      %v778 = vpop.permute.xlu0 %777
      %v780 = vunpack.c.l.b16 %v225
      %v781 = vpack.c.b16 %v780, %v780
      %v783 = vshrl.u32 %v707, 16
      %v785 = vshll.u32 %v707, 16
      %v787 = vrot.slane %v785, 1
      %v788 = vor.u32 %v783, %v787
      %v790 = vshll.u32 %v708, 16
      %v792 = vrot.slane %v790, 1
      %v793 = vsel %vm355, %v788, %v792
      %v794 = vshrl.u32 %v708, 16
      %v796 = vor.u32 %v794, %v792
      %v798 = vshll.u32 %v709, 16
      %v800 = vrot.slane %v798, 1
      %v801 = vsel %vm355, %v796, %v800
      %v802 = vshrl.u32 %v709, 16
      %v804 = vor.u32 %v802, %v800
      %v806 = vshll.u32 %v710, 16
      %v808 = vrot.slane %v806, 1
      %v809 = vsel %vm355, %v804, %v808
      %v810 = vshrl.u32 %v710, 16
      %v812 = vor.u32 %v810, %v808
      %v814 = vshll.u32 %v711, 16
      %v816 = vrot.slane %v814, 1
      %v817 = vsel %vm355, %v812, %v816
      %v818 = vshrl.u32 %v711, 16
      %v820 = vor.u32 %v818, %v816
      %v822 = vshll.u32 %v712, 16
      %v824 = vrot.slane %v822, 1
      %v825 = vsel %vm355, %v820, %v824
      %v826 = vshrl.u32 %v712, 16
      %v828 = vor.u32 %v826, %v824
      %v830 = vshll.u32 %v713, 16
      %v832 = vrot.slane %v830, 1
      %v833 = vsel %vm355, %v828, %v832
      %v834 = vshrl.u32 %v713, 16
      %v836 = vor.u32 %v834, %v832
      %v838 = vshll.u32 %v714, 16
      %v840 = vrot.slane %v838, 1
      %v841 = vsel %vm355, %v836, %v840
      %v842 = vshrl.u32 %v714, 16
      %v844 = vor.u32 %v842, %v840
      %v846 = vshll.u32 %v715, 16
      %v848 = vrot.slane %v846, 1
      %v849 = vsel %vm355, %v844, %v848
      %v850 = vshrl.u32 %v715, 16
      %v852 = vor.u32 %v850, %v848
      %v854 = vshll.u32 %v716, 16
      %v856 = vrot.slane %v854, 1
      %v857 = vsel %vm355, %v852, %v856
      %v858 = vshrl.u32 %v716, 16
      %v860 = vor.u32 %v858, %v856
      %v862 = vshll.u32 %v717, 16
      %v864 = vrot.slane %v862, 1
      %v865 = vsel %vm355, %v860, %v864
      %v866 = vshrl.u32 %v717, 16
      %v868 = vor.u32 %v866, %v864
      %v870 = vshll.u32 %v718, 16
      %v872 = vrot.slane %v870, 1
      %v873 = vsel %vm355, %v868, %v872
      %v874 = vshrl.u32 %v718, 16
      %v876 = vor.u32 %v874, %v872
      %v878 = vshll.u32 %v719, 16
      %v880 = vrot.slane %v878, 1
      %v881 = vsel %vm355, %v876, %v880
      %v882 = vshrl.u32 %v719, 16
      %v884 = vor.u32 %v882, %v880
      %v886 = vshll.u32 %v720, 16
      %v888 = vrot.slane %v886, 1
      %v889 = vsel %vm355, %v884, %v888
      %v890 = vshrl.u32 %v720, 16
      %v892 = vor.u32 %v890, %v888
      %v894 = vshll.u32 %v721, 16
      %v896 = vrot.slane %v894, 1
      %v897 = vsel %vm355, %v892, %v896
      %v898 = vshrl.u32 %v721, 16
      %v900 = vor.u32 %v898, %v896
      %v902 = vshll.u32 %v722, 16
      %v904 = vrot.slane %v902, 1
      %v905 = vsel %vm355, %v900, %v904
      %v906 = vshrl.u32 %v722, 16
      %v908 = vor.u32 %v906, %v904
      %v910 = vshll.u32 %v723, 16
      %v912 = vrot.slane %v910, 1
      %v913 = vsel %vm355, %v908, %v912
      %v914 = vshrl.u32 %v723, 16
      %v916 = vor.u32 %v914, %v912
      %v918 = vshll.u32 %v724, 16
      %v920 = vrot.slane %v918, 1
      %v921 = vsel %vm355, %v916, %v920
      %v922 = vshrl.u32 %v724, 16
      %v924 = vor.u32 %v922, %v920
      %v926 = vshll.u32 %v725, 16
      %v928 = vrot.slane %v926, 1
      %v929 = vsel %vm355, %v924, %v928
      %v930 = vshrl.u32 %v725, 16
      %v932 = vor.u32 %v930, %v928
      %v934 = vshll.u32 %v726, 16
      %v936 = vrot.slane %v934, 1
      %v937 = vsel %vm355, %v932, %v936
      %v938 = vshrl.u32 %v726, 16
      %v940 = vor.u32 %v938, %v936
      %v942 = vshll.u32 %v727, 16
      %v944 = vrot.slane %v942, 1
      %v945 = vsel %vm355, %v940, %v944
      %v946 = vshrl.u32 %v727, 16
      %v948 = vor.u32 %v946, %v944
      %v950 = vshll.u32 %v728, 16
      %v952 = vrot.slane %v950, 1
      %v953 = vsel %vm355, %v948, %v952
      %v954 = vshrl.u32 %v728, 16
      %v956 = vor.u32 %v954, %v952
      %v958 = vshll.u32 %v729, 16
      %v960 = vrot.slane %v958, 1
      %v961 = vsel %vm355, %v956, %v960
      %v962 = vshrl.u32 %v729, 16
      %v964 = vor.u32 %v962, %v960
      %v966 = vshll.u32 %v730, 16
      %v968 = vrot.slane %v966, 1
      %v969 = vsel %vm355, %v964, %v968
      %v970 = vshrl.u32 %v730, 16
      %v972 = vor.u32 %v970, %v968
      %v974 = vshll.u32 %v781, 16
      %v976 = vrot.slane %v974, 1
      %v977 = vsel %vm355, %v972, %v976
      %978 = vrot.lane.b32.xlu0 %v793, 16
      %v979 = vpop.permute.xlu0 %978
      %980 = vrot.lane.b32.xlu0 %v801, 16
      %v981 = vpop.permute.xlu0 %980
      %982 = vrot.lane.b32.xlu0 %v809, 16
      %v983 = vpop.permute.xlu0 %982
      %984 = vrot.lane.b32.xlu0 %v817, 16
      %v985 = vpop.permute.xlu0 %984
      %986 = vrot.lane.b32.xlu0 %v825, 16
      %v987 = vpop.permute.xlu0 %986
      %988 = vrot.lane.b32.xlu0 %v833, 16
      %v989 = vpop.permute.xlu0 %988
      %990 = vrot.lane.b32.xlu0 %v841, 16
      %v991 = vpop.permute.xlu0 %990
      %992 = vrot.lane.b32.xlu0 %v849, 16
      %v993 = vpop.permute.xlu0 %992
      %994 = vrot.lane.b32.xlu0 %v857, 16
      %v995 = vpop.permute.xlu0 %994
      %996 = vrot.lane.b32.xlu0 %v865, 16
      %v997 = vpop.permute.xlu0 %996
      %998 = vrot.lane.b32.xlu0 %v873, 16
      %v999 = vpop.permute.xlu0 %998
      %1000 = vrot.lane.b32.xlu0 %v881, 16
      %v1001 = vpop.permute.xlu0 %1000
      %1002 = vrot.lane.b32.xlu0 %v889, 16
      %v1003 = vpop.permute.xlu0 %1002
      %1004 = vrot.lane.b32.xlu0 %v897, 16
      %v1005 = vpop.permute.xlu0 %1004
      %1006 = vrot.lane.b32.xlu0 %v905, 16
      %v1007 = vpop.permute.xlu0 %1006
      %1008 = vrot.lane.b32.xlu0 %v913, 16
      %v1009 = vpop.permute.xlu0 %1008
      %1010 = vrot.lane.b32.xlu0 %v921, 16
      %v1011 = vpop.permute.xlu0 %1010
      %1012 = vrot.lane.b32.xlu0 %v929, 16
      %v1013 = vpop.permute.xlu0 %1012
      %1014 = vrot.lane.b32.xlu0 %v937, 16
      %v1015 = vpop.permute.xlu0 %1014
      %1016 = vrot.lane.b32.xlu0 %v945, 16
      %v1017 = vpop.permute.xlu0 %1016
      %1018 = vrot.lane.b32.xlu0 %v953, 16
      %v1019 = vpop.permute.xlu0 %1018
      %1020 = vrot.lane.b32.xlu0 %v961, 16
      %v1021 = vpop.permute.xlu0 %1020
      %1022 = vrot.lane.b32.xlu0 %v969, 16
      %v1023 = vpop.permute.xlu0 %1022
      %1024 = vrot.lane.b32.xlu0 %v977, 16
      %v1025 = vpop.permute.xlu0 %1024
      %v1027 = vunpack.c.l.b16 %v226
      %v1028 = vpack.c.b16 %v284, %v1027
      %v1029 = vrot.slane %v1028, 1
      %v1030 = vrot.slane %v708, 1
      %v1031 = vsel %vm603, %v1029, %v1030
      %v1032 = vrot.slane %v709, 1
      %v1033 = vsel %vm603, %v1030, %v1032
      %v1034 = vrot.slane %v710, 1
      %v1035 = vsel %vm603, %v1032, %v1034
      %v1036 = vrot.slane %v711, 1
      %v1037 = vsel %vm603, %v1034, %v1036
      %v1038 = vrot.slane %v712, 1
      %v1039 = vsel %vm603, %v1036, %v1038
      %v1040 = vrot.slane %v713, 1
      %v1041 = vsel %vm603, %v1038, %v1040
      %v1042 = vrot.slane %v714, 1
      %v1043 = vsel %vm603, %v1040, %v1042
      %v1044 = vrot.slane %v715, 1
      %v1045 = vsel %vm603, %v1042, %v1044
      %v1046 = vrot.slane %v716, 1
      %v1047 = vsel %vm603, %v1044, %v1046
      %v1048 = vrot.slane %v717, 1
      %v1049 = vsel %vm603, %v1046, %v1048
      %v1050 = vrot.slane %v718, 1
      %v1051 = vsel %vm603, %v1048, %v1050
      %v1052 = vrot.slane %v719, 1
      %v1053 = vsel %vm603, %v1050, %v1052
      %v1054 = vrot.slane %v720, 1
      %v1055 = vsel %vm603, %v1052, %v1054
      %v1056 = vrot.slane %v721, 1
      %v1057 = vsel %vm603, %v1054, %v1056
      %v1058 = vrot.slane %v722, 1
      %v1059 = vsel %vm603, %v1056, %v1058
      %v1060 = vrot.slane %v723, 1
      %v1061 = vsel %vm603, %v1058, %v1060
      %v1062 = vrot.slane %v724, 1
      %v1063 = vsel %vm603, %v1060, %v1062
      %v1064 = vrot.slane %v725, 1
      %v1065 = vsel %vm603, %v1062, %v1064
      %v1066 = vrot.slane %v726, 1
      %v1067 = vsel %vm603, %v1064, %v1066
      %v1068 = vrot.slane %v727, 1
      %v1069 = vsel %vm603, %v1066, %v1068
      %v1070 = vrot.slane %v728, 1
      %v1071 = vsel %vm603, %v1068, %v1070
      %v1072 = vrot.slane %v729, 1
      %v1073 = vsel %vm603, %v1070, %v1072
      %v1074 = vrot.slane %v730, 1
      %v1075 = vsel %vm603, %v1072, %v1074
      %v1076 = vrot.slane %v781, 1
      %v1077 = vsel %vm603, %v1074, %v1076
      %1078 = vrot.lane.b32.xlu0 %v1031, 20
      %v1079 = vpop.permute.xlu0 %1078
      %1080 = vrot.lane.b32.xlu0 %v1033, 20
      %v1081 = vpop.permute.xlu0 %1080
      %1082 = vrot.lane.b32.xlu0 %v1035, 20
      %v1083 = vpop.permute.xlu0 %1082
      %1084 = vrot.lane.b32.xlu0 %v1037, 20
      %v1085 = vpop.permute.xlu0 %1084
      %1086 = vrot.lane.b32.xlu0 %v1039, 20
      %v1087 = vpop.permute.xlu0 %1086
      %1088 = vrot.lane.b32.xlu0 %v1041, 20
      %v1089 = vpop.permute.xlu0 %1088
      %1090 = vrot.lane.b32.xlu0 %v1043, 20
      %v1091 = vpop.permute.xlu0 %1090
      %1092 = vrot.lane.b32.xlu0 %v1045, 20
      %v1093 = vpop.permute.xlu0 %1092
      %1094 = vrot.lane.b32.xlu0 %v1047, 20
      %v1095 = vpop.permute.xlu0 %1094
      %1096 = vrot.lane.b32.xlu0 %v1049, 20
      %v1097 = vpop.permute.xlu0 %1096
      %1098 = vrot.lane.b32.xlu0 %v1051, 20
      %v1099 = vpop.permute.xlu0 %1098
      %1100 = vrot.lane.b32.xlu0 %v1053, 20
      %v1101 = vpop.permute.xlu0 %1100
      %1102 = vrot.lane.b32.xlu0 %v1055, 20
      %v1103 = vpop.permute.xlu0 %1102
      %1104 = vrot.lane.b32.xlu0 %v1057, 20
      %v1105 = vpop.permute.xlu0 %1104
      %1106 = vrot.lane.b32.xlu0 %v1059, 20
      %v1107 = vpop.permute.xlu0 %1106
      %1108 = vrot.lane.b32.xlu0 %v1061, 20
      %v1109 = vpop.permute.xlu0 %1108
      %1110 = vrot.lane.b32.xlu0 %v1063, 20
      %v1111 = vpop.permute.xlu0 %1110
      %1112 = vrot.lane.b32.xlu0 %v1065, 20
      %v1113 = vpop.permute.xlu0 %1112
      %1114 = vrot.lane.b32.xlu0 %v1067, 20
      %v1115 = vpop.permute.xlu0 %1114
      %1116 = vrot.lane.b32.xlu0 %v1069, 20
      %v1117 = vpop.permute.xlu0 %1116
      %1118 = vrot.lane.b32.xlu0 %v1071, 20
      %v1119 = vpop.permute.xlu0 %1118
      %1120 = vrot.lane.b32.xlu0 %v1073, 20
      %v1121 = vpop.permute.xlu0 %1120
      %1122 = vrot.lane.b32.xlu0 %v1075, 20
      %v1123 = vpop.permute.xlu0 %1122
      %1124 = vrot.lane.b32.xlu0 %v1077, 20
      %v1125 = vpop.permute.xlu0 %1124
      %v1129 = vunpack.c.l.b16 %v227
      %v1130 = vunpack.c.l.b16 %v228
      %v1131 = vunpack.c.l.b16 %v229
      %v1132 = vpack.c.b16 %v705, %v704
      %v1133 = vpack.c.b16 %v1129, %v706
      %v1134 = vpack.c.b16 %v1131, %v1130
      %1135 = vrot.lane.b32.xlu0 %v331, 24
      %v1136 = vpop.permute.xlu0 %1135
      %1137 = vrot.lane.b32.xlu0 %v332, 24
      %v1138 = vpop.permute.xlu0 %1137
      %1139 = vrot.lane.b32.xlu0 %v333, 24
      %v1140 = vpop.permute.xlu0 %1139
      %1141 = vrot.lane.b32.xlu0 %v334, 24
      %v1142 = vpop.permute.xlu0 %1141
      %1143 = vrot.lane.b32.xlu0 %v335, 24
      %v1144 = vpop.permute.xlu0 %1143
      %1145 = vrot.lane.b32.xlu0 %v336, 24
      %v1146 = vpop.permute.xlu0 %1145
      %1147 = vrot.lane.b32.xlu0 %v337, 24
      %v1148 = vpop.permute.xlu0 %1147
      %1149 = vrot.lane.b32.xlu0 %v338, 24
      %v1150 = vpop.permute.xlu0 %1149
      %1151 = vrot.lane.b32.xlu0 %v339, 24
      %v1152 = vpop.permute.xlu0 %1151
      %1153 = vrot.lane.b32.xlu0 %v340, 24
      %v1154 = vpop.permute.xlu0 %1153
      %1155 = vrot.lane.b32.xlu0 %v341, 24
      %v1156 = vpop.permute.xlu0 %1155
      %1157 = vrot.lane.b32.xlu0 %v342, 24
      %v1158 = vpop.permute.xlu0 %1157
      %1159 = vrot.lane.b32.xlu0 %v343, 24
      %v1160 = vpop.permute.xlu0 %1159
      %1161 = vrot.lane.b32.xlu0 %v344, 24
      %v1162 = vpop.permute.xlu0 %1161
      %1163 = vrot.lane.b32.xlu0 %v345, 24
      %v1164 = vpop.permute.xlu0 %1163
      %1165 = vrot.lane.b32.xlu0 %v346, 24
      %v1166 = vpop.permute.xlu0 %1165
      %1167 = vrot.lane.b32.xlu0 %v347, 24
      %v1168 = vpop.permute.xlu0 %1167
      %1169 = vrot.lane.b32.xlu0 %v348, 24
      %v1170 = vpop.permute.xlu0 %1169
      %1171 = vrot.lane.b32.xlu0 %v349, 24
      %v1172 = vpop.permute.xlu0 %1171
      %1173 = vrot.lane.b32.xlu0 %v350, 24
      %v1174 = vpop.permute.xlu0 %1173
      %1175 = vrot.lane.b32.xlu0 %v351, 24
      %v1176 = vpop.permute.xlu0 %1175
      %1177 = vrot.lane.b32.xlu0 %v1132, 24
      %v1178 = vpop.permute.xlu0 %1177
      %1179 = vrot.lane.b32.xlu0 %v1133, 24
      %v1180 = vpop.permute.xlu0 %1179
      %1181 = vrot.lane.b32.xlu0 %v1134, 24
      %v1182 = vpop.permute.xlu0 %1181
      %v1184 = vunpack.c.l.b16 %v230
      %v1185 = vpack.c.b16 %v1184, %v1184
      %v1187 = vshll.u32 %v1132, 16
      %v1189 = vrot.slane %v1187, 1
      %v1190 = vsel %vm355, %v546, %v1189
      %v1191 = vshrl.u32 %v1132, 16
      %v1193 = vor.u32 %v1191, %v1189
      %v1195 = vshll.u32 %v1133, 16
      %v1197 = vrot.slane %v1195, 1
      %v1198 = vsel %vm355, %v1193, %v1197
      %v1199 = vshrl.u32 %v1133, 16
      %v1201 = vor.u32 %v1199, %v1197
      %v1203 = vshll.u32 %v1134, 16
      %v1205 = vrot.slane %v1203, 1
      %v1206 = vsel %vm355, %v1201, %v1205
      %v1207 = vshrl.u32 %v1134, 16
      %v1209 = vor.u32 %v1207, %v1205
      %v1211 = vshll.u32 %v1185, 16
      %v1213 = vrot.slane %v1211, 1
      %v1214 = vsel %vm355, %v1209, %v1213
      %1215 = vrot.lane.b32.xlu0 %v391, 28
      %v1216 = vpop.permute.xlu0 %1215
      %1217 = vrot.lane.b32.xlu0 %v399, 28
      %v1218 = vpop.permute.xlu0 %1217
      %1219 = vrot.lane.b32.xlu0 %v407, 28
      %v1220 = vpop.permute.xlu0 %1219
      %1221 = vrot.lane.b32.xlu0 %v415, 28
      %v1222 = vpop.permute.xlu0 %1221
      %1223 = vrot.lane.b32.xlu0 %v423, 28
      %v1224 = vpop.permute.xlu0 %1223
      %1225 = vrot.lane.b32.xlu0 %v431, 28
      %v1226 = vpop.permute.xlu0 %1225
      %1227 = vrot.lane.b32.xlu0 %v439, 28
      %v1228 = vpop.permute.xlu0 %1227
      %1229 = vrot.lane.b32.xlu0 %v447, 28
      %v1230 = vpop.permute.xlu0 %1229
      %1231 = vrot.lane.b32.xlu0 %v455, 28
      %v1232 = vpop.permute.xlu0 %1231
      %1233 = vrot.lane.b32.xlu0 %v463, 28
      %v1234 = vpop.permute.xlu0 %1233
      %1235 = vrot.lane.b32.xlu0 %v471, 28
      %v1236 = vpop.permute.xlu0 %1235
      %1237 = vrot.lane.b32.xlu0 %v479, 28
      %v1238 = vpop.permute.xlu0 %1237
      %1239 = vrot.lane.b32.xlu0 %v487, 28
      %v1240 = vpop.permute.xlu0 %1239
      %1241 = vrot.lane.b32.xlu0 %v495, 28
      %v1242 = vpop.permute.xlu0 %1241
      %1243 = vrot.lane.b32.xlu0 %v503, 28
      %v1244 = vpop.permute.xlu0 %1243
      %1245 = vrot.lane.b32.xlu0 %v511, 28
      %v1246 = vpop.permute.xlu0 %1245
      %1247 = vrot.lane.b32.xlu0 %v519, 28
      %v1248 = vpop.permute.xlu0 %1247
      %1249 = vrot.lane.b32.xlu0 %v527, 28
      %v1250 = vpop.permute.xlu0 %1249
      %1251 = vrot.lane.b32.xlu0 %v535, 28
      %v1252 = vpop.permute.xlu0 %1251
      %1253 = vrot.lane.b32.xlu0 %v543, 28
      %v1254 = vpop.permute.xlu0 %1253
      %1255 = vrot.lane.b32.xlu0 %v1190, 28
      %v1256 = vpop.permute.xlu0 %1255
      %1257 = vrot.lane.b32.xlu0 %v1198, 28
      %v1258 = vpop.permute.xlu0 %1257
      %1259 = vrot.lane.b32.xlu0 %v1206, 28
      %v1260 = vpop.permute.xlu0 %1259
      %1261 = vrot.lane.b32.xlu0 %v1214, 28
      %v1262 = vpop.permute.xlu0 %1261
      %v1264 = vunpack.c.l.b16 %v231
      %v1265 = vpack.c.b16 %v287, %v1264
      %v1266 = vrot.slane %v1265, 1
      %v1267 = vsel %vm603, %v1266, %v611
      %v1268 = vrot.slane %v1132, 1
      %v1269 = vsel %vm603, %v649, %v1268
      %v1270 = vrot.slane %v1133, 1
      %v1271 = vsel %vm603, %v1268, %v1270
      %v1272 = vrot.slane %v1134, 1
      %v1273 = vsel %vm603, %v1270, %v1272
      %v1274 = vrot.slane %v1185, 1
      %v1275 = vsel %vm603, %v1272, %v1274
      %1276 = vrot.lane.b32.xlu0 %v1267, 32
      %v1277 = vpop.permute.xlu0 %1276
      %1278 = vrot.lane.b32.xlu0 %v614, 32
      %v1279 = vpop.permute.xlu0 %1278
      %1280 = vrot.lane.b32.xlu0 %v616, 32
      %v1281 = vpop.permute.xlu0 %1280
      %1282 = vrot.lane.b32.xlu0 %v618, 32
      %v1283 = vpop.permute.xlu0 %1282
      %1284 = vrot.lane.b32.xlu0 %v620, 32
      %v1285 = vpop.permute.xlu0 %1284
      %1286 = vrot.lane.b32.xlu0 %v622, 32
      %v1287 = vpop.permute.xlu0 %1286
      %1288 = vrot.lane.b32.xlu0 %v624, 32
      %v1289 = vpop.permute.xlu0 %1288
      %1290 = vrot.lane.b32.xlu0 %v626, 32
      %v1291 = vpop.permute.xlu0 %1290
      %1292 = vrot.lane.b32.xlu0 %v628, 32
      %v1293 = vpop.permute.xlu0 %1292
      %1294 = vrot.lane.b32.xlu0 %v630, 32
      %v1295 = vpop.permute.xlu0 %1294
      %1296 = vrot.lane.b32.xlu0 %v632, 32
      %v1297 = vpop.permute.xlu0 %1296
      %1298 = vrot.lane.b32.xlu0 %v634, 32
      %v1299 = vpop.permute.xlu0 %1298
      %1300 = vrot.lane.b32.xlu0 %v636, 32
      %v1301 = vpop.permute.xlu0 %1300
      %1302 = vrot.lane.b32.xlu0 %v638, 32
      %v1303 = vpop.permute.xlu0 %1302
      %1304 = vrot.lane.b32.xlu0 %v640, 32
      %v1305 = vpop.permute.xlu0 %1304
      %1306 = vrot.lane.b32.xlu0 %v642, 32
      %v1307 = vpop.permute.xlu0 %1306
      %1308 = vrot.lane.b32.xlu0 %v644, 32
      %v1309 = vpop.permute.xlu0 %1308
      %1310 = vrot.lane.b32.xlu0 %v646, 32
      %v1311 = vpop.permute.xlu0 %1310
      %1312 = vrot.lane.b32.xlu0 %v648, 32
      %v1313 = vpop.permute.xlu0 %1312
      %1314 = vrot.lane.b32.xlu0 %v650, 32
      %v1315 = vpop.permute.xlu0 %1314
      %1316 = vrot.lane.b32.xlu0 %v1269, 32
      %v1317 = vpop.permute.xlu0 %1316
      %1318 = vrot.lane.b32.xlu0 %v1271, 32
      %v1319 = vpop.permute.xlu0 %1318
      %1320 = vrot.lane.b32.xlu0 %v1273, 32
      %v1321 = vpop.permute.xlu0 %1320
      %1322 = vrot.lane.b32.xlu0 %v1275, 32
      %v1323 = vpop.permute.xlu0 %1322
      %vm1324 = vcmask 31744
      %v1326 = vsel %vm1324, %v328, %v553
      %v1328 = vsel %vm1324, %v329, %v555
      %v1330 = vsel %vm1324, %v330, %v557
      %v1332 = vsel %vm1324, %v331, %v559
      %v1334 = vsel %vm1324, %v332, %v561
      %v1336 = vsel %vm1324, %v333, %v563
      %v1338 = vsel %vm1324, %v334, %v565
      %v1340 = vsel %vm1324, %v335, %v567
      %v1342 = vsel %vm1324, %v336, %v569
      %v1344 = vsel %vm1324, %v337, %v571
      %v1346 = vsel %vm1324, %v338, %v573
      %v1348 = vsel %vm1324, %v339, %v575
      %v1350 = vsel %vm1324, %v340, %v577
      %v1352 = vsel %vm1324, %v341, %v579
      %v1354 = vsel %vm1324, %v342, %v581
      %v1356 = vsel %vm1324, %v343, %v583
      %v1358 = vsel %vm1324, %v344, %v585
      %v1360 = vsel %vm1324, %v345, %v587
      %v1362 = vsel %vm1324, %v346, %v589
      %v1364 = vsel %vm1324, %v347, %v591
      %v1366 = vsel %vm1324, %v348, %v593
      %v1368 = vsel %vm1324, %v349, %v595
      %v1370 = vsel %vm1324, %v350, %v597
      %v1372 = vsel %vm1324, %v351, %v599
      %vm1373 = vcmask 64512
      %v1375 = vsel %vm1373, %v1326, %v654
      %v1377 = vsel %vm1373, %v1328, %v656
      %v1379 = vsel %vm1373, %v1330, %v658
      %v1381 = vsel %vm1373, %v1332, %v660
      %v1383 = vsel %vm1373, %v1334, %v662
      %v1385 = vsel %vm1373, %v1336, %v664
      %v1387 = vsel %vm1373, %v1338, %v666
      %v1389 = vsel %vm1373, %v1340, %v668
      %v1391 = vsel %vm1373, %v1342, %v670
      %v1393 = vsel %vm1373, %v1344, %v672
      %v1395 = vsel %vm1373, %v1346, %v674
      %v1397 = vsel %vm1373, %v1348, %v676
      %v1399 = vsel %vm1373, %v1350, %v678
      %v1401 = vsel %vm1373, %v1352, %v680
      %v1403 = vsel %vm1373, %v1354, %v682
      %v1405 = vsel %vm1373, %v1356, %v684
      %v1407 = vsel %vm1373, %v1358, %v686
      %v1409 = vsel %vm1373, %v1360, %v688
      %v1411 = vsel %vm1373, %v1362, %v690
      %v1413 = vsel %vm1373, %v1364, %v692
      %v1415 = vsel %vm1373, %v1366, %v694
      %v1417 = vsel %vm1373, %v1368, %v696
      %v1419 = vsel %vm1373, %v1370, %v698
      %v1421 = vsel %vm1373, %v1372, %v700
      %vm1422 = vcmask 97280
      %v1424 = vsel %vm1422, %v1375, %v732
      %v1426 = vsel %vm1422, %v1377, %v734
      %v1428 = vsel %vm1422, %v1379, %v736
      %v1430 = vsel %vm1422, %v1381, %v738
      %v1432 = vsel %vm1422, %v1383, %v740
      %v1434 = vsel %vm1422, %v1385, %v742
      %v1436 = vsel %vm1422, %v1387, %v744
      %v1438 = vsel %vm1422, %v1389, %v746
      %v1440 = vsel %vm1422, %v1391, %v748
      %v1442 = vsel %vm1422, %v1393, %v750
      %v1444 = vsel %vm1422, %v1395, %v752
      %v1446 = vsel %vm1422, %v1397, %v754
      %v1448 = vsel %vm1422, %v1399, %v756
      %v1450 = vsel %vm1422, %v1401, %v758
      %v1452 = vsel %vm1422, %v1403, %v760
      %v1454 = vsel %vm1422, %v1405, %v762
      %v1456 = vsel %vm1422, %v1407, %v764
      %v1458 = vsel %vm1422, %v1409, %v766
      %v1460 = vsel %vm1422, %v1411, %v768
      %v1462 = vsel %vm1422, %v1413, %v770
      %v1464 = vsel %vm1422, %v1415, %v772
      %v1466 = vsel %vm1422, %v1417, %v774
      %v1468 = vsel %vm1422, %v1419, %v776
      %v1470 = vsel %vm1422, %v1421, %v778
      %vm1471 = vcmask 130048
      %v1473 = vsel %vm1471, %v1424, %v979
      %v1475 = vsel %vm1471, %v1426, %v981
      %v1477 = vsel %vm1471, %v1428, %v983
      %v1479 = vsel %vm1471, %v1430, %v985
      %v1481 = vsel %vm1471, %v1432, %v987
      %v1483 = vsel %vm1471, %v1434, %v989
      %v1485 = vsel %vm1471, %v1436, %v991
      %v1487 = vsel %vm1471, %v1438, %v993
      %v1489 = vsel %vm1471, %v1440, %v995
      %v1491 = vsel %vm1471, %v1442, %v997
      %v1493 = vsel %vm1471, %v1444, %v999
      %v1495 = vsel %vm1471, %v1446, %v1001
      %v1497 = vsel %vm1471, %v1448, %v1003
      %v1499 = vsel %vm1471, %v1450, %v1005
      %v1501 = vsel %vm1471, %v1452, %v1007
      %v1503 = vsel %vm1471, %v1454, %v1009
      %v1505 = vsel %vm1471, %v1456, %v1011
      %v1507 = vsel %vm1471, %v1458, %v1013
      %v1509 = vsel %vm1471, %v1460, %v1015
      %v1511 = vsel %vm1471, %v1462, %v1017
      %v1513 = vsel %vm1471, %v1464, %v1019
      %v1515 = vsel %vm1471, %v1466, %v1021
      %v1517 = vsel %vm1471, %v1468, %v1023
      %v1519 = vsel %vm1471, %v1470, %v1025
      %vm1520 = vcmask 162816
      %v1522 = vsel %vm1520, %v1473, %v1079
      %v1524 = vsel %vm1520, %v1475, %v1081
      %v1526 = vsel %vm1520, %v1477, %v1083
      %v1528 = vsel %vm1520, %v1479, %v1085
      %v1530 = vsel %vm1520, %v1481, %v1087
      %v1532 = vsel %vm1520, %v1483, %v1089
      %v1534 = vsel %vm1520, %v1485, %v1091
      %v1536 = vsel %vm1520, %v1487, %v1093
      %v1538 = vsel %vm1520, %v1489, %v1095
      %v1540 = vsel %vm1520, %v1491, %v1097
      %v1542 = vsel %vm1520, %v1493, %v1099
      %v1544 = vsel %vm1520, %v1495, %v1101
      %v1546 = vsel %vm1520, %v1497, %v1103
      %v1548 = vsel %vm1520, %v1499, %v1105
      %v1550 = vsel %vm1520, %v1501, %v1107
      %v1552 = vsel %vm1520, %v1503, %v1109
      %v1554 = vsel %vm1520, %v1505, %v1111
      %v1556 = vsel %vm1520, %v1507, %v1113
      %v1558 = vsel %vm1520, %v1509, %v1115
      %v1560 = vsel %vm1520, %v1511, %v1117
      %v1562 = vsel %vm1520, %v1513, %v1119
      %v1564 = vsel %vm1520, %v1515, %v1121
      %v1566 = vsel %vm1520, %v1517, %v1123
      %v1568 = vsel %vm1520, %v1519, %v1125
      %vm1569 = vcmask 195584
      %v1571 = vsel %vm1569, %v1522, %v1136
      %v1573 = vsel %vm1569, %v1524, %v1138
      %v1575 = vsel %vm1569, %v1526, %v1140
      %v1577 = vsel %vm1569, %v1528, %v1142
      %v1579 = vsel %vm1569, %v1530, %v1144
      %v1581 = vsel %vm1569, %v1532, %v1146
      %v1583 = vsel %vm1569, %v1534, %v1148
      %v1585 = vsel %vm1569, %v1536, %v1150
      %v1587 = vsel %vm1569, %v1538, %v1152
      %v1589 = vsel %vm1569, %v1540, %v1154
      %v1591 = vsel %vm1569, %v1542, %v1156
      %v1593 = vsel %vm1569, %v1544, %v1158
      %v1595 = vsel %vm1569, %v1546, %v1160
      %v1597 = vsel %vm1569, %v1548, %v1162
      %v1599 = vsel %vm1569, %v1550, %v1164
      %v1601 = vsel %vm1569, %v1552, %v1166
      %v1603 = vsel %vm1569, %v1554, %v1168
      %v1605 = vsel %vm1569, %v1556, %v1170
      %v1607 = vsel %vm1569, %v1558, %v1172
      %v1609 = vsel %vm1569, %v1560, %v1174
      %v1611 = vsel %vm1569, %v1562, %v1176
      %v1613 = vsel %vm1569, %v1564, %v1178
      %v1615 = vsel %vm1569, %v1566, %v1180
      %v1617 = vsel %vm1569, %v1568, %v1182
      %vm1618 = vcmask 228352
      %v1620 = vsel %vm1618, %v1571, %v1216
      %v1622 = vsel %vm1618, %v1573, %v1218
      %v1624 = vsel %vm1618, %v1575, %v1220
      %v1626 = vsel %vm1618, %v1577, %v1222
      %v1628 = vsel %vm1618, %v1579, %v1224
      %v1630 = vsel %vm1618, %v1581, %v1226
      %v1632 = vsel %vm1618, %v1583, %v1228
      %v1634 = vsel %vm1618, %v1585, %v1230
      %v1636 = vsel %vm1618, %v1587, %v1232
      %v1638 = vsel %vm1618, %v1589, %v1234
      %v1640 = vsel %vm1618, %v1591, %v1236
      %v1642 = vsel %vm1618, %v1593, %v1238
      %v1644 = vsel %vm1618, %v1595, %v1240
      %v1646 = vsel %vm1618, %v1597, %v1242
      %v1648 = vsel %vm1618, %v1599, %v1244
      %v1650 = vsel %vm1618, %v1601, %v1246
      %v1652 = vsel %vm1618, %v1603, %v1248
      %v1654 = vsel %vm1618, %v1605, %v1250
      %v1656 = vsel %vm1618, %v1607, %v1252
      %v1658 = vsel %vm1618, %v1609, %v1254
      %v1660 = vsel %vm1618, %v1611, %v1256
      %v1662 = vsel %vm1618, %v1613, %v1258
      %v1664 = vsel %vm1618, %v1615, %v1260
      %v1666 = vsel %vm1618, %v1617, %v1262
      %vm1667 = vcmask 261120
      %v1669 = vsel %vm1667, %v1620, %v1277
      %v1671 = vsel %vm1667, %v1622, %v1279
      %v1673 = vsel %vm1667, %v1624, %v1281
      %v1675 = vsel %vm1667, %v1626, %v1283
      %v1677 = vsel %vm1667, %v1628, %v1285
      %v1679 = vsel %vm1667, %v1630, %v1287
      %v1681 = vsel %vm1667, %v1632, %v1289
      %v1683 = vsel %vm1667, %v1634, %v1291
      %v1685 = vsel %vm1667, %v1636, %v1293
      %v1687 = vsel %vm1667, %v1638, %v1295
      %v1689 = vsel %vm1667, %v1640, %v1297
      %v1691 = vsel %vm1667, %v1642, %v1299
      %v1693 = vsel %vm1667, %v1644, %v1301
      %v1695 = vsel %vm1667, %v1646, %v1303
      %v1697 = vsel %vm1667, %v1648, %v1305
      %v1699 = vsel %vm1667, %v1650, %v1307
      %v1701 = vsel %vm1667, %v1652, %v1309
      %v1703 = vsel %vm1667, %v1654, %v1311
      %v1705 = vsel %vm1667, %v1656, %v1313
      %v1707 = vsel %vm1667, %v1658, %v1315
      %v1709 = vsel %vm1667, %v1660, %v1317
      %v1711 = vsel %vm1667, %v1662, %v1319
      %v1713 = vsel %vm1667, %v1664, %v1321
      %v1715 = vsel %vm1667, %v1666, %v1323
      %v1716 = vld [vmem:[%s1] sm:$0xf]
      %v1717 = vld [vmem:[%s1 + $0x4] sm:$0xf]
      %v1718 = vld [vmem:[%s1 + $0x8] sm:$0xf]
      %v1719 = vld [vmem:[%s1 + $0xc] sm:$0xf]
      %v1720 = vld [vmem:[%s1 + $0x10] sm:$0x3]
      %v1721 = vld [vmem:[%s2] sm:$0x1]
      %v1723 = vlaneseq
      %v1724 = vshrl.u32 %v1723, 7
      %v1725 = vsub.s32 0, %v1724
      %v1726 = vrot.slane %v1721, %v1725
      %v1733 = vunpack.c.l.b16 %v1716
      %v1734 = vunpack.c.l.b16 %v1717
      %v1735 = vunpack.c.l.b16 %v1718
      %v1736 = vunpack.c.l.b16 %v1719
      %v1737 = vunpack.c.l.b16 %v1720
      %v1738 = vpack.c.b16 %v1734, %v1733
      %v1739 = vpack.c.b16 %v1736, %v1735
      %v1740 = vpack.c.b16 %v1737, %v1737
      %vm1743 = vcmask 293888
      %v1744 = vsel %vm1743, %v1669, 0
      %v1746 = vsel %vm1743, %v1671, 0
      %v1748 = vsel %vm1743, %v1673, 0
      %v1750 = vsel %vm1743, %v1675, 0
      %v1752 = vsel %vm1743, %v1677, 0
      %v1754 = vsel %vm1743, %v1679, 0
      %v1756 = vsel %vm1743, %v1681, 0
      %v1758 = vsel %vm1743, %v1683, 0
      %v1760 = vsel %vm1743, %v1685, 0
      %v1762 = vsel %vm1743, %v1687, 0
      %v1764 = vsel %vm1743, %v1689, 0
      %v1766 = vsel %vm1743, %v1691, 0
      %v1768 = vsel %vm1743, %v1693, 0
      %v1770 = vsel %vm1743, %v1695, 0
      %v1772 = vsel %vm1743, %v1697, 0
      %v1774 = vsel %vm1743, %v1699, 0
      %v1776 = vsel %vm1743, %v1701, 0
      %v1778 = vsel %vm1743, %v1703, 0
      %v1780 = vsel %vm1743, %v1705, 0
      %v1782 = vsel %vm1743, %v1707, 0
      %v1784 = vsel %vm1743, %v1709, 0
      %v1786 = vsel %vm1743, %v1711, 0
      %v1788 = vsel %vm1743, %v1713, 0
      %v1790 = vsel %vm1743, %v1715, 0
      %vm1792 = vcmask 1041408
      %v1794 = vsel %vm1792, %v1740, 0
      %1796 = vmatprep.subr.bf16.mxu0 0
      %1797 = vmatpush1.bf16.msra.mxu0 %v1738
      %1798 = vmatprep.subr.bf16.mxu0 0
      %1799 = vmatpush1.bf16.msra.mxu0 %v1739
      %1800 = vmatprep.subr.bf16.mxu0 0
      %1801 = vmatpush1.bf16.msra.mxu0 %v1794
      %1802 = vmatprep.subr.bf16.mxu0 0
      %1803 = vmatpush1.bf16.msra.mxu0 0
      %1804 = vmatprep.subr.bf16.mxu0 0
      %1805 = vmatpush1.bf16.msra.mxu0 0
      %1806 = vmatprep.subr.bf16.mxu0 0
      %1807 = vmatpush1.bf16.msra.mxu0 0
      %1808 = vmatprep.subr.bf16.mxu0 0
      %1809 = vmatpush1.bf16.msra.mxu0 0
      %1810 = vmatprep.subr.bf16.mxu0 0
      %1811 = vmatpush1.bf16.msra.mxu0 0
      %1812 = vmatprep.subr.bf16.mxu0 0
      %1813 = vmatpush1.bf16.msra.mxu0 0
      %1814 = vmatprep.subr.bf16.mxu0 0
      %1815 = vmatpush1.bf16.msra.mxu0 0
      %1816 = vmatprep.subr.bf16.mxu0 0
      %1817 = vmatpush1.bf16.msra.mxu0 0
      %1818 = vmatprep.subr.bf16.mxu0 0
      %1819 = vmatpush1.bf16.msra.mxu0 0
      %1820 = vmatprep.subr.bf16.mxu0 0
      %1821 = vmatpush1.bf16.msra.mxu0 0
      %1822 = vmatprep.subr.bf16.mxu0 0
      %1823 = vmatpush1.bf16.msra.mxu0 0
      %1824 = vmatprep.subr.bf16.mxu0 0
      %1825 = vmatpush1.bf16.msra.mxu0 0
      %1826 = vmatprep.subr.bf16.mxu0 0
      %1827 = vmatpush1.bf16.msra.mxu0 0
      %1828 = vmatprep.mubr.bf16.mxu0 0
      %1829 = vmatmul.mubr.bf16.gmra.mrb[0].mxu0 %v1744
      %v1830 = vpop.f32.mrb[0].mxu0
      %v1831 = vadd.f32 %v1726, %v1830
      %v1832 = vpop.f32.mrb[0].mxu0
      %v1833 = vpop.f32.mrb[0].mxu0
      %v1834 = vadd.f32 %v1726, %v1833
      %v1835 = vpop.f32.mrb[0].mxu0
      %1836 = vmatprep.mubr.bf16.mxu0 0
      %1837 = vmatmul.mubr.bf16.gmra.mrb[0].mxu0 %v1746
      %v1838 = vpop.f32.mrb[0].mxu0
      %v1839 = vpop.f32.mrb[0].mxu0
      %v1840 = vpop.f32.mrb[0].mxu0
      %v1841 = vadd.f32 %v1726, %v1840
      %v1842 = vpop.f32.mrb[0].mxu0
      %1843 = vmatprep.mubr.bf16.mxu0 0
      %1844 = vmatmul.mubr.bf16.gmra.mrb[0].mxu0 %v1748
      %v1845 = vpop.f32.mrb[0].mxu0
      %v1846 = vadd.f32 %v1726, %v1845
      %v1847 = vpop.f32.mrb[0].mxu0
      %v1848 = vpop.f32.mrb[0].mxu0
      %v1849 = vpop.f32.mrb[0].mxu0
      %1850 = vmatprep.mubr.bf16.mxu0 0
      %1851 = vmatmul.mubr.bf16.gmra.mrb[0].mxu0 %v1750
      %v1852 = vpop.f32.mrb[0].mxu0
      %v1853 = vadd.f32 %v1726, %v1852
      %v1854 = vpop.f32.mrb[0].mxu0
      %v1855 = vpop.f32.mrb[0].mxu0
      %v1856 = vadd.f32 %v1726, %v1855
      %v1857 = vpop.f32.mrb[0].mxu0
      %1858 = vmatprep.mubr.bf16.mxu0 0
      %1859 = vmatmul.mubr.bf16.gmra.mrb[0].mxu0 %v1752
      %v1860 = vpop.f32.mrb[0].mxu0
      %v1861 = vpop.f32.mrb[0].mxu0
      %v1862 = vpop.f32.mrb[0].mxu0
      %v1863 = vadd.f32 %v1726, %v1862
      %v1864 = vpop.f32.mrb[0].mxu0
      %1865 = vmatprep.mubr.bf16.mxu0 0
      %1866 = vmatmul.mubr.bf16.gmra.mrb[0].mxu0 %v1754
      %v1867 = vpop.f32.mrb[0].mxu0
      %v1868 = vadd.f32 %v1726, %v1867
      %v1869 = vpop.f32.mrb[0].mxu0
      %v1870 = vpop.f32.mrb[0].mxu0
      %v1871 = vpop.f32.mrb[0].mxu0
      %1872 = vmatprep.mubr.bf16.mxu0 0
      %1873 = vmatmul.mubr.bf16.gmra.mrb[0].mxu0 %v1756
      %v1874 = vpop.f32.mrb[0].mxu0
      %v1875 = vadd.f32 %v1726, %v1874
      %v1876 = vpop.f32.mrb[0].mxu0
      %v1877 = vpop.f32.mrb[0].mxu0
      %v1878 = vadd.f32 %v1726, %v1877
      %v1879 = vpop.f32.mrb[0].mxu0
      %1880 = vmatprep.mubr.bf16.mxu0 0
      %1881 = vmatmul.mubr.bf16.gmra.mrb[0].mxu0 %v1758
      %v1882 = vpop.f32.mrb[0].mxu0
      %v1883 = vpop.f32.mrb[0].mxu0
      %v1884 = vpop.f32.mrb[0].mxu0
      %v1885 = vadd.f32 %v1726, %v1884
      %v1886 = vpop.f32.mrb[0].mxu0
      %1887 = vmatprep.mubr.bf16.mxu0 0
      %1888 = vmatmul.mubr.bf16.gmra.mrb[0].mxu0 %v1760
      %v1889 = vpop.f32.mrb[0].mxu0
      %v1890 = vadd.f32 %v1726, %v1889
      %v1891 = vpop.f32.mrb[0].mxu0
      %v1892 = vpop.f32.mrb[0].mxu0
      %v1893 = vpop.f32.mrb[0].mxu0
      %1894 = vmatprep.mubr.bf16.mxu0 0
      %1895 = vmatmul.mubr.bf16.gmra.mrb[0].mxu0 %v1762
      %v1896 = vpop.f32.mrb[0].mxu0
      %v1897 = vadd.f32 %v1726, %v1896
      %v1898 = vpop.f32.mrb[0].mxu0
      %v1899 = vpop.f32.mrb[0].mxu0
      %v1900 = vadd.f32 %v1726, %v1899
      %v1901 = vpop.f32.mrb[0].mxu0
      %1902 = vmatprep.mubr.bf16.mxu0 0
      %1903 = vmatmul.mubr.bf16.gmra.mrb[0].mxu0 %v1764
      %v1904 = vpop.f32.mrb[0].mxu0
      %v1905 = vpop.f32.mrb[0].mxu0
      %v1906 = vpop.f32.mrb[0].mxu0
      %v1907 = vadd.f32 %v1726, %v1906
      %v1908 = vpop.f32.mrb[0].mxu0
      %1909 = vmatprep.mubr.bf16.mxu0 0
      %1910 = vmatmul.mubr.bf16.gmra.mrb[0].mxu0 %v1766
      %v1911 = vpop.f32.mrb[0].mxu0
      %v1912 = vadd.f32 %v1726, %v1911
      %v1913 = vpop.f32.mrb[0].mxu0
      %v1914 = vpop.f32.mrb[0].mxu0
      %v1915 = vpop.f32.mrb[0].mxu0
      %1916 = vmatprep.mubr.bf16.mxu0 0
      %1917 = vmatmul.mubr.bf16.gmra.mrb[0].mxu0 %v1768
      %v1918 = vpop.f32.mrb[0].mxu0
      %v1919 = vadd.f32 %v1726, %v1918
      %v1920 = vpop.f32.mrb[0].mxu0
      %v1921 = vpop.f32.mrb[0].mxu0
      %v1922 = vadd.f32 %v1726, %v1921
      %v1923 = vpop.f32.mrb[0].mxu0
      %1924 = vmatprep.mubr.bf16.mxu0 0
      %1925 = vmatmul.mubr.bf16.gmra.mrb[0].mxu0 %v1770
      %v1926 = vpop.f32.mrb[0].mxu0
      %v1927 = vpop.f32.mrb[0].mxu0
      %v1928 = vpop.f32.mrb[0].mxu0
      %v1929 = vadd.f32 %v1726, %v1928
      %v1930 = vpop.f32.mrb[0].mxu0
      %1931 = vmatprep.mubr.bf16.mxu0 0
      %1932 = vmatmul.mubr.bf16.gmra.mrb[0].mxu0 %v1772
      %v1933 = vpop.f32.mrb[0].mxu0
      %v1934 = vadd.f32 %v1726, %v1933
      %v1935 = vpop.f32.mrb[0].mxu0
      %v1936 = vpop.f32.mrb[0].mxu0
      %v1937 = vpop.f32.mrb[0].mxu0
      %1938 = vmatprep.mubr.bf16.mxu0 0
      %1939 = vmatmul.mubr.bf16.gmra.mrb[0].mxu0 %v1774
      %v1940 = vpop.f32.mrb[0].mxu0
      %v1941 = vadd.f32 %v1726, %v1940
      %v1942 = vpop.f32.mrb[0].mxu0
      %v1943 = vpop.f32.mrb[0].mxu0
      %v1944 = vadd.f32 %v1726, %v1943
      %v1945 = vpop.f32.mrb[0].mxu0
      %1946 = vmatprep.mubr.bf16.mxu0 0
      %1947 = vmatmul.mubr.bf16.gmra.mrb[0].mxu0 %v1776
      %v1948 = vpop.f32.mrb[0].mxu0
      %v1949 = vpop.f32.mrb[0].mxu0
      %v1950 = vpop.f32.mrb[0].mxu0
      %v1951 = vadd.f32 %v1726, %v1950
      %v1952 = vpop.f32.mrb[0].mxu0
      %1953 = vmatprep.mubr.bf16.mxu0 0
      %1954 = vmatmul.mubr.bf16.gmra.mrb[0].mxu0 %v1778
      %v1955 = vpop.f32.mrb[0].mxu0
      %v1956 = vadd.f32 %v1726, %v1955
      %v1957 = vpop.f32.mrb[0].mxu0
      %v1958 = vpop.f32.mrb[0].mxu0
      %v1959 = vpop.f32.mrb[0].mxu0
      %1960 = vmatprep.mubr.bf16.mxu0 0
      %1961 = vmatmul.mubr.bf16.gmra.mrb[0].mxu0 %v1780
      %v1962 = vpop.f32.mrb[0].mxu0
      %v1963 = vadd.f32 %v1726, %v1962
      %v1964 = vpop.f32.mrb[0].mxu0
      %v1965 = vpop.f32.mrb[0].mxu0
      %v1966 = vadd.f32 %v1726, %v1965
      %v1967 = vpop.f32.mrb[0].mxu0
      %1968 = vmatprep.mubr.bf16.mxu0 0
      %1969 = vmatmul.mubr.bf16.gmra.mrb[0].mxu0 %v1782
      %v1970 = vpop.f32.mrb[0].mxu0
      %v1971 = vpop.f32.mrb[0].mxu0
      %v1972 = vpop.f32.mrb[0].mxu0
      %v1973 = vadd.f32 %v1726, %v1972
      %v1974 = vpop.f32.mrb[0].mxu0
      %1975 = vmatprep.mubr.bf16.mxu0 0
      %1976 = vmatmul.mubr.bf16.gmra.mrb[0].mxu0 %v1784
      %v1977 = vpop.f32.mrb[0].mxu0
      %v1978 = vadd.f32 %v1726, %v1977
      %v1979 = vpop.f32.mrb[0].mxu0
      %v1980 = vpop.f32.mrb[0].mxu0
      %v1981 = vpop.f32.mrb[0].mxu0
      %1982 = vmatprep.mubr.bf16.mxu0 0
      %1983 = vmatmul.mubr.bf16.gmra.mrb[0].mxu0 %v1786
      %v1984 = vpop.f32.mrb[0].mxu0
      %v1985 = vadd.f32 %v1726, %v1984
      %v1986 = vpop.f32.mrb[0].mxu0
      %v1987 = vpop.f32.mrb[0].mxu0
      %v1988 = vadd.f32 %v1726, %v1987
      %v1989 = vpop.f32.mrb[0].mxu0
      %1990 = vmatprep.mubr.bf16.mxu0 0
      %1991 = vmatmul.mubr.bf16.gmra.mrb[0].mxu0 %v1788
      %v1992 = vpop.f32.mrb[0].mxu0
      %v1993 = vpop.f32.mrb[0].mxu0
      %v1994 = vpop.f32.mrb[0].mxu0
      %v1995 = vadd.f32 %v1726, %v1994
      %v1996 = vpop.f32.mrb[0].mxu0
      %1997 = vmatprep.mubr.bf16.mxu0 0
      %1998 = vmatmul.mubr.bf16.gmra.mrb[0].mxu0 %v1790
      %v1999 = vpop.f32.mrb[0].mxu0
      %v2000 = vadd.f32 %v1726, %v1999
      %v2001 = vpop.f32.mrb[0].mxu0
      %v2002 = vpop.f32.mrb[0].mxu0
      %v2003 = vpop.f32.mrb[0].mxu0
      %2004 = vdwg.mxu0
      %v2005 = vmax.f32 %v1831, 0.0
      %v2006 = vmax.f32 %v1834, 0.0
      %v2007 = vmax.f32 %v1841, 0.0
      %v2008 = vmax.f32 %v1846, 0.0
      %v2009 = vmax.f32 %v1853, 0.0
      %v2010 = vmax.f32 %v1856, 0.0
      %v2011 = vmax.f32 %v1863, 0.0
      %v2012 = vmax.f32 %v1868, 0.0
      %v2013 = vmax.f32 %v1875, 0.0
      %v2014 = vmax.f32 %v1878, 0.0
      %v2015 = vmax.f32 %v1885, 0.0
      %v2016 = vmax.f32 %v1890, 0.0
      %v2017 = vmax.f32 %v1897, 0.0
      %v2018 = vmax.f32 %v1900, 0.0
      %v2019 = vmax.f32 %v1907, 0.0
      %v2020 = vmax.f32 %v1912, 0.0
      %v2021 = vmax.f32 %v1919, 0.0
      %v2022 = vmax.f32 %v1922, 0.0
      %v2023 = vmax.f32 %v1929, 0.0
      %v2024 = vmax.f32 %v1934, 0.0
      %v2025 = vmax.f32 %v1941, 0.0
      %v2026 = vmax.f32 %v1944, 0.0
      %v2027 = vmax.f32 %v1951, 0.0
      %v2028 = vmax.f32 %v1956, 0.0
      %v2029 = vmax.f32 %v1963, 0.0
      %v2030 = vmax.f32 %v1966, 0.0
      %v2031 = vmax.f32 %v1973, 0.0
      %v2032 = vmax.f32 %v1978, 0.0
      %v2033 = vmax.f32 %v1985, 0.0
      %v2034 = vmax.f32 %v1988, 0.0
      %v2035 = vmax.f32 %v1995, 0.0
      %v2036 = vmax.f32 %v2000, 0.0
      %2037 = vst [vmem:[%s170] sm:$0xff] %v2005
      %2038 = vst [vmem:[%s170 + $0x8] sm:$0xff] %v2006
      %2039 = vst [vmem:[%s170 + $0x10] sm:$0xff] %v2007
      %2040 = vst [vmem:[%s170 + $0x18] sm:$0xff] %v2008
      %2041 = vst [vmem:[%s170 + $0x20] sm:$0xff] %v2009
      %2042 = vst [vmem:[%s170 + $0x28] sm:$0xff] %v2010
      %2043 = vst [vmem:[%s170 + $0x30] sm:$0xff] %v2011
      %2044 = vst [vmem:[%s170 + $0x38] sm:$0xff] %v2012
      %2045 = vst [vmem:[%s170 + $0x40] sm:$0xff] %v2013
      %2046 = vst [vmem:[%s170 + $0x48] sm:$0xff] %v2014
      %2047 = vst [vmem:[%s170 + $0x50] sm:$0xff] %v2015
      %2048 = vst [vmem:[%s170 + $0x58] sm:$0xff] %v2016
      %2049 = vst [vmem:[%s170 + $0x60] sm:$0xff] %v2017
      %2050 = vst [vmem:[%s170 + $0x68] sm:$0xff] %v2018
      %2051 = vst [vmem:[%s170 + $0x70] sm:$0xff] %v2019
      %2052 = vst [vmem:[%s170 + $0x78] sm:$0xff] %v2020
      %2053 = vst [vmem:[%s170 + $0x80] sm:$0xff] %v2021
      %2054 = vst [vmem:[%s170 + $0x88] sm:$0xff] %v2022
      %2055 = vst [vmem:[%s170 + $0x90] sm:$0xff] %v2023
      %2056 = vst [vmem:[%s170 + $0x98] sm:$0xff] %v2024
      %2057 = vst [vmem:[%s170 + $0xa0] sm:$0xff] %v2025
      %2058 = vst [vmem:[%s170 + $0xa8] sm:$0xff] %v2026
      %2059 = vst [vmem:[%s170 + $0xb0] sm:$0xff] %v2027
      %2060 = vst [vmem:[%s170 + $0xb8] sm:$0xff] %v2028
      %2061 = vst [vmem:[%s170 + $0xc0] sm:$0xff] %v2029
      %2062 = vst [vmem:[%s170 + $0xc8] sm:$0xff] %v2030
      %2063 = vst [vmem:[%s170 + $0xd0] sm:$0xff] %v2031
      %2064 = vst [vmem:[%s170 + $0xd8] sm:$0xff] %v2032
      %2065 = vst [vmem:[%s170 + $0xe0] sm:$0xff] %v2033
      %2066 = vst [vmem:[%s170 + $0xe8] sm:$0xff] %v2034
      %2067 = vst [vmem:[%s170 + $0xf0] sm:$0xff] %v2035
      %2068 = vst [vmem:[%s170 + $0xf8] sm:$0xff] %v2036
      %p2069 = scmp.lt.s32.totalorder %s14, 1
      %s2070 = scalar_select %p2069, %s14, 1
      %s2071 = smul.addr %s2070, 32
      %s2072 = smul.addr %s2071, 8
      %s2073 = scalar_lea.vmem %s3, %s2072
      // Predicated region
      $region33: #{conv_relu_forward.1} parent=31 // pred_check
        %p2074 = pneg %p100
      $region34: #{conv_relu_forward.1} parent=31 // pred_check_branch
        %2076 = sbr.rel (%p2074) target = $region36
      $region35: #{conv_relu_forward.1} parent=31 // pred_region
        _
      $region36: #{conv_relu_forward.1} parent=31 // pred_fallthru
        _
    $region32: #{conv_relu_forward.1} parent=5 // pred_fallthru
      _
    %p2077 = scmp.le.s32.totalorder 2, %s9
    // Predicated region
    $region37: #{conv_relu_forward.1} parent=5 // pred_check
      %p2078 = pneg %p2077
    $region38: #{conv_relu_forward.1} parent=5 // pred_check_branch
      %2080 = sbr.rel (%p2078) target = $region40
    $region39: #{conv_relu_forward.1} parent=5 // pred_region
      %s2081 = ssub.s32 %s9, 2
      // Predicated region
      $region41: #{conv_relu_forward.1} parent=39 // pred_check
        %p2082 = pneg %p106
      $region42: #{conv_relu_forward.1} parent=39 // pred_check_branch
        %2084 = sbr.rel (%p2082) target = $region44
      $region43: #{conv_relu_forward.1} parent=39 // pred_region
        %p2085 = scmp.lt.s32.totalorder %s15, 1
        %s2086 = scalar_select %p2085, %s15, 1
        %s2087 = smul.addr %s2086, 32
        %s2088 = smul.addr %s2087, 8
        %s2089 = scalar_lea.vmem %s3, %s2088
      $region44: #{conv_relu_forward.1} parent=39 // pred_fallthru
        _
    $region40: #{conv_relu_forward.1} parent=5 // pred_fallthru
      _
  $region6: #{conv_relu_forward.1} parent=0 // loop_footer
    %s13 = sadd.s32 1, %s9
  $region7: #{conv_relu_forward.1} parent=0 // loop_footer_branch
    %8 = sbr.rel target = $region3
  $region8: #{conv_relu_forward.1} parent=0 // loop_exit
    _

</llo_original>
